<compile_context>
chip_gen: v7x
topology: tpu7x:2x2x1
jax: 0.10.0
libtpu: 0.0.40
codegen_flags: <defaults>
</compile_context>

<pallas_src>
import functools

import jax
import jax.numpy as jnp
from jax.experimental import pallas as pl
from jax.experimental.pallas import tpu as pltpu

C_IN = 3                 # xyz
H1, H2, H3 = 128, 128, 256
F1, F2, F3 = 256, 128, 3
OUT_PAD = 128            # fc3 output padded 3 -> 128 lanes for a dense store
ACC_LANES = 128          # lane width of the pooled-feature accumulator (>= BB)
BN_EPS = 1e-5


def _stn_kernel(pts_ref,
                w1_ref, b1_ref,
                w2_ref, b2_ref,
                w3_ref, b3_ref,
                fw1_ref, fb1_ref,
                fw2_ref, fb2_ref,
                fw3_ref, fb3_ref,
                out_ref,
                feat_acc,
                *, n_points, ragged):
    """grid = (batch blocks, point tiles).

    pts_ref  : (BB, 3, TN) f32, native channels-first points block.
    feat_acc : (H3, ACC_LANES) f32 scratch; lane b holds batch element b's
               running max over points (transposed orientation).
    out_ref  : (BB, 1, OUT_PAD) f32, written once at the last point tile.
    """
    ni = pl.program_id(1)
    bb = pts_ref.shape[0]
    tn = pts_ref.shape[2]

    @pl.when(ni == 0)
    def _init():
        feat_acc[...] = jnp.full(feat_acc.shape, -jnp.inf, feat_acc.dtype)

    # Hoisted, loop-invariant broadcasts (JAX does not CSE broadcast_in_dim).
    w1c = [jnp.broadcast_to(w1_ref[:, c:c + 1], (H1, tn)) for c in range(C_IN)]
    b1b = jnp.broadcast_to(b1_ref[...], (H1, tn))
    if ragged:
        lane = jax.lax.broadcasted_iota(jnp.int32, (1, tn), 1)
        valid = jnp.broadcast_to(ni * tn + lane < n_points, (H3, tn))

    # Transposed dataflow: one (channels x TN) chain per batch element.  BB is a
    # small static int (<= 8), so this Python loop is unrolled at trace time.
    for b in range(bb):
        xb = pts_ref[b]                                   # (3, TN) f32

        # conv1 (+ folded BN1, ReLU): K = 3 -> three f32 VPU broadcast FMAs.
        # TODO(synk): if VALU turns out to be the binding slot, pad channels
        # 3 -> 8 in-kernel and run conv1 on the (idle) MXU instead.
        h = jnp.maximum(
            w1c[0] * xb[0:1, :] + w1c[1] * xb[1:2, :] + w1c[2] * xb[2:3, :]
            + b1b, 0.0)                                   # (H1, TN) f32

        # conv2 / conv3 (+ folded BN, ReLU): bf16 MXU matmuls, f32 accumulation.
        h = jnp.maximum(
            jnp.dot(w2_ref[...], h.astype(jnp.bfloat16),
                    preferred_element_type=jnp.float32) + b2_ref[...], 0.0)
        h = jnp.maximum(
            jnp.dot(w3_ref[...], h.astype(jnp.bfloat16),
                    preferred_element_type=jnp.float32) + b3_ref[...], 0.0)
                                                          # (H3, TN) f32

        if ragged:
            # Last (cdiv) tile may read past N: mask those lanes out of the max.
            h = jnp.where(valid, h, -jnp.inf)

        # torch.max(x, 2)[0]: running max over the points (lane) axis.
        tmax = jnp.max(h, axis=1, keepdims=True)          # (H3, 1)
        feat_acc[:, b:b + 1] = jnp.maximum(feat_acc[:, b:b + 1], tmax)

    # FC head once per batch block, after the last point tile.
    @pl.when(ni == pl.num_programs(1) - 1)
    def _finalize():
        # Aligned (256, 128) -> (128, 256) transpose, then keep the BB real rows.
        feat = jnp.transpose(feat_acc[...])[0:bb, :]      # (BB, H3) f32
        g = jnp.maximum(
            jnp.dot(feat.astype(jnp.bfloat16), fw1_ref[...],
                    preferred_element_type=jnp.float32) + fb1_ref[...], 0.0)
        g = jnp.maximum(
            jnp.dot(g.astype(jnp.bfloat16), fw2_ref[...],
                    preferred_element_type=jnp.float32) + fb2_ref[...], 0.0)
        out = jnp.dot(g.astype(jnp.bfloat16), fw3_ref[...],
                      preferred_element_type=jnp.float32) + fb3_ref[...]
        out_ref[:, 0, :] = out                            # (BB, OUT_PAD)


# ------------------------------ tiling helpers ------------------------------ #

def _vmem_budget():
    """(vmem_limit_bytes, BB*TN row cap) chosen per TPU generation."""
    try:
        cap = int(pltpu.get_tpu_info().vmem_capacity_bytes)
    except Exception:
        cap = 64 << 20                     # conservative: v7x per-core physical
    if cap >= (100 << 20):                 # v5e / v6e: 128 MiB physical VMEM
        return 96 << 20, 8192
    return 48 << 20, 4096                  # v7x: 64 MiB physical, leave headroom


def _pick_bb(B):
    """Largest divisor of B that is <= 8 and leaves >= 2 batch blocks (v7x
    megacore) whenever B >= 2."""
    if B <= 1:
        return 1
    target = min(8, max(1, B // 2))
    for bb in range(target, 0, -1):
        if B % bb == 0:
            return bb
    return 1


def _pick_tn(N, row_cap, bb):
    """Lane-dense point tile: multiple of 128 (or == N when N <= 128), jointly
    capped so BB * TN <= row_cap.  Ragged N is handled with a cdiv grid."""
    if N <= 128:
        return N                            # block dim == full dim is legal
    cap = max(128, row_cap // bb)
    tn = min(cap, 2048, (N // 128) * 128)
    return max(128, (tn // 128) * 128)


# --------------------------------- wrapper ----------------------------------- #

def stn_forward(pts_b3n, params):
    """pts_b3n: (B, 3, N) float32 in the native PyTorch Conv1d layout.

    Returns the STN translation prediction, shape (B, 3) float32.
    """
    B, C, N = pts_b3n.shape
    assert C == C_IN
    pts = pts_b3n.astype(jnp.float32)

    vmem_limit, row_cap = _vmem_budget()
    BB = _pick_bb(B)
    TN = _pick_tn(N, row_cap, BB)
    n_tiles = pl.cdiv(N, TN)
    ragged = (N % TN) != 0
    grid = (B // BB, n_tiles)
    assert BB <= ACC_LANES

    kernel = functools.partial(_stn_kernel, n_points=N, ragged=ragged)

    def wspec(arr):
        nd = arr.ndim
        return pl.BlockSpec(arr.shape, lambda bi, ni, _nd=nd: (0,) * _nd)

    flops = (2 * B * N * (C_IN * H1 + H1 * H2 + H2 * H3)
             + 2 * B * (H3 * F1 + F1 * F2 + F2 * F3))
    bytes_accessed = (int(pts.size) * 4
                      + sum(int(p.size) * p.dtype.itemsize for p in params)
                      + B * OUT_PAD * 4)

    out3 = pl.pallas_call(
        kernel,
        out_shape=jax.ShapeDtypeStruct((B, 1, OUT_PAD), jnp.float32),
        grid=grid,
        in_specs=[pl.BlockSpec((BB, C_IN, TN), lambda bi, ni: (bi, 0, ni))]
                 + [wspec(p) for p in params],
        # 3-D output so BB is a leading (unconstrained) block dim; last two dims
        # (1, OUT_PAD) keep the store lane-dense for any BB.
        out_specs=pl.BlockSpec((BB, 1, OUT_PAD), lambda bi, ni: (bi, 0, 0)),
        scratch_shapes=[pltpu.VMEM((H3, ACC_LANES), jnp.float32)],
        compiler_params=pltpu.CompilerParams(
            dimension_semantics=("parallel", "arbitrary"),
            vmem_limit_bytes=vmem_limit),
        cost_estimate=pl.CostEstimate(flops=flops, transcendentals=0,
                                      bytes_accessed=bytes_accessed),
    )(pts, *params)

    return out3[:, 0, :F3]


# ----------------------------- parameter setup ------------------------------ #

def _fold_bn(W, b, gamma, beta, mean, var):
    """Fold eval-mode BN into y = W x + b.  W: (out, in).  Returns (W_eff, b_eff)."""
    scale = gamma / jnp.sqrt(var + BN_EPS)
    W_eff = W * scale[:, None]
    b_eff = b * scale + (beta - mean * scale)
    return W_eff.astype(jnp.float32), b_eff.astype(jnp.float32)


def make_params(key, zero_fc3=True):
    ks = iter(jax.random.split(key, 40))

    def lin(cout, cin):
        w = jax.random.normal(next(ks), (cout, cin), jnp.float32) * (2.0 / cin) ** 0.5
        b = 0.05 * jax.random.normal(next(ks), (cout,), jnp.float32)
        return w, b

    def bn(c):
        gamma = 1.0 + 0.1 * jax.random.normal(next(ks), (c,), jnp.float32)
        beta = 0.05 * jax.random.normal(next(ks), (c,), jnp.float32)
        mean = 0.1 * jax.random.normal(next(ks), (c,), jnp.float32)
        var = jax.random.uniform(next(ks), (c,), jnp.float32, 0.5, 1.5)
        return gamma, beta, mean, var

    bf16 = lambda a: a.astype(jnp.bfloat16)

    # conv1 (3->128), conv2 (128->128), conv3 (128->256), each + folded BN.
    # Kernel uses the transposed (out, in) orientation and (out, 1) biases.
    W1, B1 = _fold_bn(*lin(H1, C_IN), *bn(H1))
    W2, B2 = _fold_bn(*lin(H2, H1), *bn(H2))
    W3, B3 = _fold_bn(*lin(H3, H2), *bn(H3))

    # fc1 (256->256)+BN, fc2 (256->128)+BN: kernel uses (in, out) and (1, out).
    FW1, FB1 = _fold_bn(*lin(F1, H3), *bn(F1))
    FW2, FB2 = _fold_bn(*lin(F2, F1), *bn(F2))

    # fc3 (128->3): zero-initialized in the torch module; output padded 3->128.
    fw3, fb3 = lin(F3, F2)
    if zero_fc3:
        fw3 = jnp.zeros_like(fw3)
        fb3 = jnp.zeros_like(fb3)
    FW3 = jnp.zeros((F2, OUT_PAD), jnp.float32).at[:, :F3].set(fw3.T)
    FB3 = jnp.zeros((1, OUT_PAD), jnp.float32).at[0, :F3].set(fb3)

    return (W1, B1.reshape(-1, 1),                 # conv1 stays f32 (VPU path)
            bf16(W2), B2.reshape(-1, 1),
            bf16(W3), B3.reshape(-1, 1),
            bf16(FW1.T), FB1.reshape(1, -1),
            bf16(FW2.T), FB2.reshape(1, -1),
            bf16(FW3), FB3)


# ------------------------------ pure-JAX reference --------------------------- #

def ref_forward(pts_b3n, params):
    """Matches the kernel's numerics (f32 conv1, bf16 MXU inputs, f32 accum)."""
    (w1, b1, w2, b2, w3, b3, fw1, fb1, fw2, fb2, fw3, fb3) = params
    x = jnp.transpose(pts_b3n, (0, 2, 1)).astype(jnp.float32)        # (B, N, 3)
    w1t = w1.T                                                        # (3, H1)
    h = (x[..., 0:1] * w1t[0:1, :] + x[..., 1:2] * w1t[1:2, :]
         + x[..., 2:3] * w1t[2:3, :]) + b1[:, 0]
    h = jax.nn.relu(h)                                                # (B, N, H1)
    h = jax.nn.relu(jnp.dot(h.astype(jnp.bfloat16), w2.T,
                            preferred_element_type=jnp.float32) + b2[:, 0])
    h = jax.nn.relu(jnp.dot(h.astype(jnp.bfloat16), w3.T,
                            preferred_element_type=jnp.float32) + b3[:, 0])
    feat = jnp.max(h, axis=1)                                         # (B, H3)
    g = jax.nn.relu(jnp.dot(feat.astype(jnp.bfloat16), fw1,
                            preferred_element_type=jnp.float32) + fb1)
    g = jax.nn.relu(jnp.dot(g.astype(jnp.bfloat16), fw2,
                            preferred_element_type=jnp.float32) + fb2)
    out = jnp.dot(g.astype(jnp.bfloat16), fw3,
                  preferred_element_type=jnp.float32) + fb3
    return out[:, :F3]


if __name__ == "__main__":
    key = jax.random.PRNGKey(0)
    k_param, k_pts, k_pts2 = jax.random.split(key, 3)

    # fc3 is zero-initialized in the torch module; use small random fc3 values
    # here so the fc3 matmul / output path is numerically exercised by the check.
    params = make_params(k_param, zero_fc3=False)

    # Small case: B=2 (BB=1 -> 2 parallel batch blocks), N=128 (single tile).
    B, N = 2, 128
    pts = jax.random.normal(k_pts, (B, C_IN, N), jnp.float32)        # (B, 3, N)
    out = jax.block_until_ready(stn_forward(pts, params))
    ref = ref_forward(pts, params)
    assert out.shape == (B, F3) and out.dtype == jnp.float32
    assert jnp.allclose(out, ref, atol=5e-2, rtol=2e-2), \
        float(jnp.max(jnp.abs(out - ref)))

    # Second case: multi batch block + ragged point count (masked cdiv tile).
    B2, N2 = 4, 200
    pts2 = jax.random.normal(k_pts2, (B2, C_IN, N2), jnp.float32)
    out2 = jax.block_until_ready(stn_forward(pts2, params))
    ref2 = ref_forward(pts2, params)
    assert jnp.allclose(out2, ref2, atol=5e-2, rtol=2e-2), \
        float(jnp.max(jnp.abs(out2 - ref2)))

    print("KERNEL_OK")
</pallas_src>

<mosaic_0001>
module attributes {stable_mosaic.version = 11 : i64} {
  func.func @_stn_kernel(%arg0: i32, %arg1: i32, %arg2: memref<1x3x128xf32, #tpu.memory_space<vmem>>, %arg3: memref<128x3xf32, #tpu.memory_space<vmem>>, %arg4: memref<128x1xf32, #tpu.memory_space<vmem>>, %arg5: memref<128x128xbf16, #tpu.memory_space<vmem>>, %arg6: memref<128x1xf32, #tpu.memory_space<vmem>>, %arg7: memref<256x128xbf16, #tpu.memory_space<vmem>>, %arg8: memref<256x1xf32, #tpu.memory_space<vmem>>, %arg9: memref<256x256xbf16, #tpu.memory_space<vmem>>, %arg10: memref<1x256xf32, #tpu.memory_space<vmem>>, %arg11: memref<256x128xbf16, #tpu.memory_space<vmem>>, %arg12: memref<1x128xf32, #tpu.memory_space<vmem>>, %arg13: memref<128x128xbf16, #tpu.memory_space<vmem>>, %arg14: memref<1x128xf32, #tpu.memory_space<vmem>>, %arg15: memref<1x1x128xf32, #tpu.memory_space<vmem>>, %arg16: memref<256x128xf32, #tpu.memory_space<vmem>>) attributes {dimension_semantics = [#tpu.dimension_semantics<parallel>, #tpu.dimension_semantics<arbitrary>], iteration_bounds = array<i64: 2, 1>, scalar_prefetch = 0 : i64, scratch_operands = 1 : i64, tpu.core_type = #tpu.core_type<tc>, window_params = [{transform_indices = @transform_0, window_bounds = array<i64: 1, 3, 128>}, {pipeline_mode = #tpu.pipeline_mode<synchronous>, transform_indices = @transform_1, window_bounds = array<i64: 128, 3>}, {pipeline_mode = #tpu.pipeline_mode<synchronous>, transform_indices = @transform_2, window_bounds = array<i64: 128, 1>}, {pipeline_mode = #tpu.pipeline_mode<synchronous>, transform_indices = @transform_3, window_bounds = array<i64: 128, 128>}, {pipeline_mode = #tpu.pipeline_mode<synchronous>, transform_indices = @transform_4, window_bounds = array<i64: 128, 1>}, {pipeline_mode = #tpu.pipeline_mode<synchronous>, transform_indices = @transform_5, window_bounds = array<i64: 256, 128>}, {pipeline_mode = #tpu.pipeline_mode<synchronous>, transform_indices = @transform_6, window_bounds = array<i64: 256, 1>}, {pipeline_mode = #tpu.pipeline_mode<synchronous>, transform_indices = @transform_7, window_bounds = array<i64: 256, 256>}, {pipeline_mode = #tpu.pipeline_mode<synchronous>, transform_indices = @transform_8, window_bounds = array<i64: 1, 256>}, {pipeline_mode = #tpu.pipeline_mode<synchronous>, transform_indices = @transform_9, window_bounds = array<i64: 256, 128>}, {pipeline_mode = #tpu.pipeline_mode<synchronous>, transform_indices = @transform_10, window_bounds = array<i64: 1, 128>}, {pipeline_mode = #tpu.pipeline_mode<synchronous>, transform_indices = @transform_11, window_bounds = array<i64: 128, 128>}, {pipeline_mode = #tpu.pipeline_mode<synchronous>, transform_indices = @transform_12, window_bounds = array<i64: 1, 128>}, {transform_indices = @transform_13, window_bounds = array<i64: 1, 1, 128>}]} {
    %c0_i32 = arith.constant 0 : i32
    %0 = arith.cmpi eq, %arg1, %c0_i32 : i32
    %1 = arith.extui %0 : i1 to i32
    %c0_i32_0 = arith.constant 0 : i32
    %2 = arith.cmpi ne, %1, %c0_i32_0 : i32
    scf.if %2 {
      %cst_28 = arith.constant 0xFF800000 : f32
      %55 = vector.broadcast %cst_28 : f32 to vector<256x128xf32>
      %c0_29 = arith.constant 0 : index
      %c0_30 = arith.constant 0 : index
      %56 = vector.load %arg16[%c0_29, %c0_30] : memref<256x128xf32, #tpu.memory_space<vmem>>, vector<256x128xf32>
      tpu.vector_store %arg16[%c0_29, %c0_30], %55 {strides = array<i32>} : memref<256x128xf32, #tpu.memory_space<vmem>>, vector<256x128xf32>,
    } else {
    }
    %c0 = arith.constant 0 : index
    %c0_1 = arith.constant 0 : index
    %3 = vector.load %arg3[%c0, %c0_1] : memref<128x3xf32, #tpu.memory_space<vmem>>, vector<128x1xf32>
    %4 = vector.shape_cast %3 : vector<128x1xf32> to vector<128x1xf32>
    %5 = vector.broadcast %4 : vector<128x1xf32> to vector<128x128xf32>
    %c0_2 = arith.constant 0 : index
    %c1 = arith.constant 1 : index
    %6 = vector.load %arg3[%c0_2, %c1] : memref<128x3xf32, #tpu.memory_space<vmem>>, vector<128x1xf32>
    %7 = vector.shape_cast %6 : vector<128x1xf32> to vector<128x1xf32>
    %8 = vector.broadcast %7 : vector<128x1xf32> to vector<128x128xf32>
    %c0_3 = arith.constant 0 : index
    %c2 = arith.constant 2 : index
    %9 = vector.load %arg3[%c0_3, %c2] : memref<128x3xf32, #tpu.memory_space<vmem>>, vector<128x1xf32>
    %10 = vector.shape_cast %9 : vector<128x1xf32> to vector<128x1xf32>
    %11 = vector.broadcast %10 : vector<128x1xf32> to vector<128x128xf32>
    %c0_4 = arith.constant 0 : index
    %c0_5 = arith.constant 0 : index
    %12 = vector.load %arg4[%c0_4, %c0_5] : memref<128x1xf32, #tpu.memory_space<vmem>>, vector<128x1xf32>
    %13 = vector.shape_cast %12 : vector<128x1xf32> to vector<128x1xf32>
    %14 = vector.broadcast %13 : vector<128x1xf32> to vector<128x128xf32>
    %c0_6 = arith.constant 0 : index
    %c0_7 = arith.constant 0 : index
    %c0_8 = arith.constant 0 : index
    %15 = vector.load %arg2[%c0_6, %c0_7, %c0_8] : memref<1x3x128xf32, #tpu.memory_space<vmem>>, vector<1x3x128xf32>
    %16 = vector.shape_cast %15 : vector<1x3x128xf32> to vector<3x128xf32>
    %17 = vector.extract_strided_slice %16 {offsets = [0, 0], sizes = [1, 128], strides = [1, 1]} : vector<3x128xf32> to vector<1x128xf32>
    %18 = vector.broadcast %17 : vector<1x128xf32> to vector<128x128xf32>
    %19 = arith.mulf %5, %18 : vector<128x128xf32>
    %20 = vector.extract_strided_slice %16 {offsets = [1, 0], sizes = [1, 128], strides = [1, 1]} : vector<3x128xf32> to vector<1x128xf32>
    %21 = vector.broadcast %20 : vector<1x128xf32> to vector<128x128xf32>
    %22 = arith.mulf %8, %21 : vector<128x128xf32>
    %23 = arith.addf %19, %22 : vector<128x128xf32>
    %24 = vector.extract_strided_slice %16 {offsets = [2, 0], sizes = [1, 128], strides = [1, 1]} : vector<3x128xf32> to vector<1x128xf32>
    %25 = vector.broadcast %24 : vector<1x128xf32> to vector<128x128xf32>
    %26 = arith.mulf %11, %25 : vector<128x128xf32>
    %27 = arith.addf %23, %26 : vector<128x128xf32>
    %28 = arith.addf %27, %14 : vector<128x128xf32>
    %cst = arith.constant 0.000000e+00 : f32
    %29 = vector.broadcast %cst : f32 to vector<128x128xf32>
    %30 = arith.maximumf %28, %29 : vector<128x128xf32>
    %c0_9 = arith.constant 0 : index
    %c0_10 = arith.constant 0 : index
    %31 = vector.load %arg5[%c0_9, %c0_10] : memref<128x128xbf16, #tpu.memory_space<vmem>>, vector<128x128xbf16>
    %32 = arith.truncf %30 : vector<128x128xf32> to vector<128x128xbf16>
    %cst_11 = arith.constant dense<0.000000e+00> : vector<128x128xf32>
    %33 = tpu.matmul %31, %32, %cst_11 {dimension_numbers = #tpu.dot_dimension_numbers<[1], [0], [0], [1], [0, 0, 1, 1], [], []>} : vector<128x128xbf16>, vector<128x128xbf16>, vector<128x128xf32> -> vector<128x128xf32>
    %c0_12 = arith.constant 0 : index
    %c0_13 = arith.constant 0 : index
    %34 = vector.load %arg6[%c0_12, %c0_13] : memref<128x1xf32, #tpu.memory_space<vmem>>, vector<128x1xf32>
    %35 = vector.broadcast %34 : vector<128x1xf32> to vector<128x128xf32>
    %36 = arith.addf %33, %35 : vector<128x128xf32>
    %cst_14 = arith.constant 0.000000e+00 : f32
    %37 = vector.broadcast %cst_14 : f32 to vector<128x128xf32>
    %38 = arith.maximumf %36, %37 : vector<128x128xf32>
    %c0_15 = arith.constant 0 : index
    %c0_16 = arith.constant 0 : index
    %39 = vector.load %arg7[%c0_15, %c0_16] : memref<256x128xbf16, #tpu.memory_space<vmem>>, vector<256x128xbf16>
    %40 = arith.truncf %38 : vector<128x128xf32> to vector<128x128xbf16>
    %cst_17 = arith.constant dense<0.000000e+00> : vector<256x128xf32>
    %41 = tpu.matmul %39, %40, %cst_17 {dimension_numbers = #tpu.dot_dimension_numbers<[1], [0], [0], [1], [0, 0, 1, 1], [], []>} : vector<256x128xbf16>, vector<128x128xbf16>, vector<256x128xf32> -> vector<256x128xf32>
    %c0_18 = arith.constant 0 : index
    %c0_19 = arith.constant 0 : index
    %42 = vector.load %arg8[%c0_18, %c0_19] : memref<256x1xf32, #tpu.memory_space<vmem>>, vector<256x1xf32>
    %43 = vector.broadcast %42 : vector<256x1xf32> to vector<256x128xf32>
    %44 = arith.addf %41, %43 : vector<256x128xf32>
    %cst_20 = arith.constant 0.000000e+00 : f32
    %45 = vector.broadcast %cst_20 : f32 to vector<256x128xf32>
    %46 = arith.maximumf %44, %45 : vector<256x128xf32>
    %cst_21 = arith.constant dense<0xFF800000> : vector<256xf32>
    %47 = vector.multi_reduction <maximumf>, %46, %cst_21 [1] : vector<256x128xf32> to vector<256xf32>
    %48 = vector.shape_cast %47 : vector<256xf32> to vector<256x1xf32>
    %c0_22 = arith.constant 0 : index
    %c0_23 = arith.constant 0 : index
    %49 = vector.load %arg16[%c0_22, %c0_23] : memref<256x128xf32, #tpu.memory_space<vmem>>, vector<256x1xf32>
    %50 = arith.maximumf %49, %48 : vector<256x1xf32>
    %c0_24 = arith.constant 0 : index
    %c0_25 = arith.constant 0 : index
    %51 = vector.load %arg16[%c0_24, %c0_25] : memref<256x128xf32, #tpu.memory_space<vmem>>, vector<256x1xf32>
    tpu.vector_store %arg16[%c0_24, %c0_25], %50 {strides = array<i32>} : memref<256x128xf32, #tpu.memory_space<vmem>>, vector<256x1xf32>,
    %c0_i32_26 = arith.constant 0 : i32
    %52 = arith.cmpi eq, %arg1, %c0_i32_26 : i32
    %53 = arith.extui %52 : i1 to i32
    %c0_i32_27 = arith.constant 0 : i32
    %54 = arith.cmpi ne, %53, %c0_i32_27 : i32
    scf.if %54 {
      %c0_28 = arith.constant 0 : index
      %c0_29 = arith.constant 0 : index
      %55 = vector.load %arg16[%c0_28, %c0_29] : memref<256x128xf32, #tpu.memory_space<vmem>>, vector<256x128xf32>
      %56 = tpu.transpose %55, [1, 0] : vector<256x128xf32> -> vector<128x256xf32>
      %57 = vector.extract_strided_slice %56 {offsets = [0, 0], sizes = [1, 256], strides = [1, 1]} : vector<128x256xf32> to vector<1x256xf32>
      %58 = arith.truncf %57 : vector<1x256xf32> to vector<1x256xbf16>
      %c0_30 = arith.constant 0 : index
      %c0_31 = arith.constant 0 : index
      %59 = vector.load %arg9[%c0_30, %c0_31] : memref<256x256xbf16, #tpu.memory_space<vmem>>, vector<256x256xbf16>
      %cst_32 = arith.constant dense<0.000000e+00> : vector<1x256xf32>
      %60 = tpu.matmul %58, %59, %cst_32 {dimension_numbers = #tpu.dot_dimension_numbers<[1], [0], [0], [1], [0, 0, 1, 1], [], []>} : vector<1x256xbf16>, vector<256x256xbf16>, vector<1x256xf32> -> vector<1x256xf32>
      %c0_33 = arith.constant 0 : index
      %c0_34 = arith.constant 0 : index
      %61 = vector.load %arg10[%c0_33, %c0_34] : memref<1x256xf32, #tpu.memory_space<vmem>>, vector<1x256xf32>
      %62 = arith.addf %60, %61 : vector<1x256xf32>
      %cst_35 = arith.constant 0.000000e+00 : f32
      %63 = vector.broadcast %cst_35 : f32 to vector<1x256xf32>
      %64 = arith.maximumf %62, %63 : vector<1x256xf32>
      %65 = arith.truncf %64 : vector<1x256xf32> to vector<1x256xbf16>
      %c0_36 = arith.constant 0 : index
      %c0_37 = arith.constant 0 : index
      %66 = vector.load %arg11[%c0_36, %c0_37] : memref<256x128xbf16, #tpu.memory_space<vmem>>, vector<256x128xbf16>
      %cst_38 = arith.constant dense<0.000000e+00> : vector<1x128xf32>
      %67 = tpu.matmul %65, %66, %cst_38 {dimension_numbers = #tpu.dot_dimension_numbers<[1], [0], [0], [1], [0, 0, 1, 1], [], []>} : vector<1x256xbf16>, vector<256x128xbf16>, vector<1x128xf32> -> vector<1x128xf32>
      %c0_39 = arith.constant 0 : index
      %c0_40 = arith.constant 0 : index
      %68 = vector.load %arg12[%c0_39, %c0_40] : memref<1x128xf32, #tpu.memory_space<vmem>>, vector<1x128xf32>
      %69 = arith.addf %67, %68 : vector<1x128xf32>
      %cst_41 = arith.constant 0.000000e+00 : f32
      %70 = vector.broadcast %cst_41 : f32 to vector<1x128xf32>
      %71 = arith.maximumf %69, %70 : vector<1x128xf32>
      %72 = arith.truncf %71 : vector<1x128xf32> to vector<1x128xbf16>
      %c0_42 = arith.constant 0 : index
      %c0_43 = arith.constant 0 : index
      %73 = vector.load %arg13[%c0_42, %c0_43] : memref<128x128xbf16, #tpu.memory_space<vmem>>, vector<128x128xbf16>
      %cst_44 = arith.constant dense<0.000000e+00> : vector<1x128xf32>
      %74 = tpu.matmul %72, %73, %cst_44 {dimension_numbers = #tpu.dot_dimension_numbers<[1], [0], [0], [1], [0, 0, 1, 1], [], []>} : vector<1x128xbf16>, vector<128x128xbf16>, vector<1x128xf32> -> vector<1x128xf32>
      %c0_45 = arith.constant 0 : index
      %c0_46 = arith.constant 0 : index
      %75 = vector.load %arg14[%c0_45, %c0_46] : memref<1x128xf32, #tpu.memory_space<vmem>>, vector<1x128xf32>
      %76 = arith.addf %74, %75 : vector<1x128xf32>
      %c0_47 = arith.constant 0 : index
      %c0_48 = arith.constant 0 : index
      %c0_49 = arith.constant 0 : index
      %77 = vector.load %arg15[%c0_47, %c0_48, %c0_49] : memref<1x1x128xf32, #tpu.memory_space<vmem>>, vector<1x1x128xf32>
      %78 = vector.shape_cast %77 : vector<1x1x128xf32> to vector<1x128xf32>
      %79 = vector.shape_cast %76 : vector<1x128xf32> to vector<1x1x128xf32>
      tpu.vector_store %arg15[%c0_47, %c0_48, %c0_49], %79 {strides = array<i32>} : memref<1x1x128xf32, #tpu.memory_space<vmem>>, vector<1x1x128xf32>,
    } else {
    }
    return
  }
  func.func @transform_0(%arg0: i32, %arg1: i32) -> (i32, i32, i32) {
    %c0_i32 = arith.constant 0 : i32
    %c0_i32_0 = arith.constant 0 : i32
    return %arg0, %c0_i32, %arg1 : i32, i32, i32
  }
  func.func @transform_1(%arg0: i32, %arg1: i32) -> (i32, i32) {
    %c0_i32 = arith.constant 0 : i32
    %c0_i32_0 = arith.constant 0 : i32
    %c0_i32_1 = arith.constant 0 : i32
    return %c0_i32, %c0_i32_0 : i32, i32
  }
  func.func @transform_2(%arg0: i32, %arg1: i32) -> (i32, i32) {
    %c0_i32 = arith.constant 0 : i32
    %c0_i32_0 = arith.constant 0 : i32
    %c0_i32_1 = arith.constant 0 : i32
    return %c0_i32, %c0_i32_0 : i32, i32
  }
  func.func @transform_3(%arg0: i32, %arg1: i32) -> (i32, i32) {
    %c0_i32 = arith.constant 0 : i32
    %c0_i32_0 = arith.constant 0 : i32
    %c0_i32_1 = arith.constant 0 : i32
    return %c0_i32, %c0_i32_0 : i32, i32
  }
  func.func @transform_4(%arg0: i32, %arg1: i32) -> (i32, i32) {
    %c0_i32 = arith.constant 0 : i32
    %c0_i32_0 = arith.constant 0 : i32
    %c0_i32_1 = arith.constant 0 : i32
    return %c0_i32, %c0_i32_0 : i32, i32
  }
  func.func @transform_5(%arg0: i32, %arg1: i32) -> (i32, i32) {
    %c0_i32 = arith.constant 0 : i32
    %c0_i32_0 = arith.constant 0 : i32
    %c0_i32_1 = arith.constant 0 : i32
    return %c0_i32, %c0_i32_0 : i32, i32
  }
  func.func @transform_6(%arg0: i32, %arg1: i32) -> (i32, i32) {
    %c0_i32 = arith.constant 0 : i32
    %c0_i32_0 = arith.constant 0 : i32
    %c0_i32_1 = arith.constant 0 : i32
    return %c0_i32, %c0_i32_0 : i32, i32
  }
  func.func @transform_7(%arg0: i32, %arg1: i32) -> (i32, i32) {
    %c0_i32 = arith.constant 0 : i32
    %c0_i32_0 = arith.constant 0 : i32
    %c0_i32_1 = arith.constant 0 : i32
    return %c0_i32, %c0_i32_0 : i32, i32
  }
  func.func @transform_8(%arg0: i32, %arg1: i32) -> (i32, i32) {
    %c0_i32 = arith.constant 0 : i32
    %c0_i32_0 = arith.constant 0 : i32
    %c0_i32_1 = arith.constant 0 : i32
    return %c0_i32, %c0_i32_0 : i32, i32
  }
  func.func @transform_9(%arg0: i32, %arg1: i32) -> (i32, i32) {
    %c0_i32 = arith.constant 0 : i32
    %c0_i32_0 = arith.constant 0 : i32
    %c0_i32_1 = arith.constant 0 : i32
    return %c0_i32, %c0_i32_0 : i32, i32
  }
  func.func @transform_10(%arg0: i32, %arg1: i32) -> (i32, i32) {
    %c0_i32 = arith.constant 0 : i32
    %c0_i32_0 = arith.constant 0 : i32
    %c0_i32_1 = arith.constant 0 : i32
    return %c0_i32, %c0_i32_0 : i32, i32
  }
  func.func @transform_11(%arg0: i32, %arg1: i32) -> (i32, i32) {
    %c0_i32 = arith.constant 0 : i32
    %c0_i32_0 = arith.constant 0 : i32
    %c0_i32_1 = arith.constant 0 : i32
    return %c0_i32, %c0_i32_0 : i32, i32
  }
  func.func @transform_12(%arg0: i32, %arg1: i32) -> (i32, i32) {
    %c0_i32 = arith.constant 0 : i32
    %c0_i32_0 = arith.constant 0 : i32
    %c0_i32_1 = arith.constant 0 : i32
    return %c0_i32, %c0_i32_0 : i32, i32
  }
  func.func @transform_13(%arg0: i32, %arg1: i32) -> (i32, i32, i32) {
    %c0_i32 = arith.constant 0 : i32
    %c0_i32_0 = arith.constant 0 : i32
    %c0_i32_1 = arith.constant 0 : i32
    return %arg0, %c0_i32, %c0_i32_0 : i32, i32, i32
  }
}

</mosaic_0001>

<llo_original>
// kernel: tpu_custom_call.1
$region0: #{tpu_custom_call.1}
  #allocation0 [shape = 'u32[]', space=smem, size = 0x4, offset = 0x4, fixed_abs, tag = 'smem constant byte address 0x4 - core index']
  #allocation1 [shape = 'u32[144,128]{1,0:T(1,128)}', space=vmem, size = 0x12000, scoped, tag = 'internal scratch']
  #allocation2 [shape = 'f32[256,128]{1,0:T(8,128)}', space=vmem, size = 0x20000, scoped, tag = 'scratch operand']
  %s0 = inlined_call_operand.vmem [shape: f32[2,3,128], index: 0, kind: input, shape index: {}]
  %s1 = inlined_call_operand.vmem [shape: f32[128,3], index: 1, kind: input, shape index: {}]
  %s2 = inlined_call_operand.vmem [shape: f32[128,1], index: 2, kind: input, shape index: {}]
  %s3 = inlined_call_operand.vmem [shape: bf16[128,128], index: 3, kind: input, shape index: {}]
  %s4 = inlined_call_operand.vmem [shape: f32[128,1], index: 4, kind: input, shape index: {}]
  %s5 = inlined_call_operand.vmem [shape: bf16[256,128], index: 5, kind: input, shape index: {}]
  %s6 = inlined_call_operand.vmem [shape: f32[256,1], index: 6, kind: input, shape index: {}]
  %s7 = inlined_call_operand.vmem [shape: bf16[256,256], index: 7, kind: input, shape index: {}]
  %s8 = inlined_call_operand.vmem [shape: f32[1,256], index: 8, kind: input, shape index: {}]
  %s9 = inlined_call_operand.vmem [shape: bf16[256,128], index: 9, kind: input, shape index: {}]
  %s10 = inlined_call_operand.vmem [shape: f32[1,128], index: 10, kind: input, shape index: {}]
  %s11 = inlined_call_operand.vmem [shape: bf16[128,128], index: 11, kind: input, shape index: {}]
  %s12 = inlined_call_operand.vmem [shape: f32[1,128], index: 12, kind: input, shape index: {}]
  %s13 = inlined_call_operand.hbm [shape: f32[2,1,128], index: 13, kind: output, shape index: {}]
  %s14 = sld [smem:[#allocation0]]
  $region93: #{tpu_custom_call.1} parent=0
    _
  %s16 = ssub.s32 1, %s14
  %s17 = scalar_select 0, %s16, %s14
  $region1: #{tpu_custom_call.1} parent=0
    #allocation3 [shape = 'u8[1024]{0}', space=vmem, size = 0x400, scoped, tag = 'output window, operand 0']
    #allocation4 [shape = 's32[2]{0}', space=sflag, size = 0x8, scoped, tag = 'scoped memory for tpu_custom_call.1']
    %18 = vsyncpa [#allocation4], 0
    %s19 = scalar_lea.sflag [#allocation4], 1
    %20 = vsyncpa %s19, 0
    loop: start=0, step=1, limit=4
    $region2: #{tpu_custom_call.1} parent=1 // loop_pre_header
      _
    $region3: #{tpu_custom_call.1} parent=1 // loop_header
      %s22 = sphi 0, %s26
      %p23 = scmp.ge.s32.totalorder %s22, 4
      %s29 = sphi 0, %s41
      %s30 = sphi 0, %s37
      %s31 = sphi 0, %s29
      %s32 = sphi 0, %s30
      %s33 = sphi 0, %s31
      %s34 = sphi 0, %s32
      %s46 = sphi 0, %s48
      %s49 = sphi 0, %s46
      %s50 = sphi 0, %s49
      %s66 = sphi 0, %s50
      %s70 = sphi 0, %s70
      %s72 = sphi 0, %s70
      %s73 = sphi 0, %s72
      %s87 = sphi 0, %s73
      %s91 = sphi 0, %s91
      %s93 = sphi 0, %s91
      %s94 = sphi 0, %s93
      %s108 = sphi 0, %s94
      %s112 = sphi 0, %s112
      %s114 = sphi 0, %s112
      %s115 = sphi 0, %s114
      %s129 = sphi 0, %s115
      %s133 = sphi 0, %s133
      %s135 = sphi 0, %s133
      %s136 = sphi 0, %s135
      %s150 = sphi 0, %s136
      %s154 = sphi 0, %s154
      %s156 = sphi 0, %s154
      %s157 = sphi 0, %s156
      %s171 = sphi 0, %s157
      %s175 = sphi 0, %s175
      %s177 = sphi 0, %s175
      %s178 = sphi 0, %s177
      %s192 = sphi 0, %s178
      %s196 = sphi 0, %s196
      %s198 = sphi 0, %s196
      %s199 = sphi 0, %s198
      %s213 = sphi 0, %s199
      %s217 = sphi 0, %s217
      %s219 = sphi 0, %s217
      %s220 = sphi 0, %s219
      %s234 = sphi 0, %s220
      %s238 = sphi 0, %s238
      %s240 = sphi 0, %s238
      %s241 = sphi 0, %s240
      %s255 = sphi 0, %s241
      %s259 = sphi 0, %s259
      %s261 = sphi 0, %s259
      %s262 = sphi 0, %s261
      %s276 = sphi 0, %s262
      %s280 = sphi 0, %s280
      %s282 = sphi 0, %s280
      %s283 = sphi 0, %s282
      %s297 = sphi 0, %s283
      %s301 = sphi 0, %s301
      %s303 = sphi 0, %s301
      %s304 = sphi 0, %s303
      %s318 = sphi 0, %s304
      %s324 = sphi 0, %s326
      %s327 = sphi 0, %s324
      %s328 = sphi 0, %s327
      %s344 = sphi 0, %s328
    $region4: #{tpu_custom_call.1} parent=1 // loop_header_branch
      %25 = sbr.rel (%p23) target = $region8
    $region5: #{tpu_custom_call.1} parent=1 // loop_body
      %s27 = ssub.s32 %s22, 1
      %s28 = ssub.s32 %s22, 2
      %s35 = sadd.s32 1, %s30
      %p36 = scmp.ge.s32.totalorder %s35, 1
      %s37 = scalar_select %p36, 0, %s35
      %s38 = sadd.s32 1, %s29
      %s39 = scalar_select %p36, %s38, %s29
      %p40 = scmp.ge.s32.totalorder %s39, 2
      %s41 = scalar_select %p40, 0, %s39
      %s42 = ssub.s32 %s29, %s41
      %s43 = ssub.s32 %s30, %s37
      %s44 = sor.u32 %s42, %s43
      %p45 = scmp.eq.s32.totalorder %s44, 0
      %s47 = sadd.s32 %s46, 1
      %s48 = scalar_select %p45, %s46, %s47
      %p51 = pneg %p45
      %p52 = scmp.eq.s32.totalorder %s22, 1
      %p53 = por %p51, %p52
      %p54 = scmp.ne.s32.totalorder %s46, %s49
      %p55 = scmp.eq.s32.totalorder %s22, 0
      %p56 = por %p54, %p55
      %p57 = scmp.ne.s32.totalorder %s46, %s49
      %p58 = scmp.eq.s32.totalorder %s27, 1
      %p59 = por %p57, %p58
      %p60 = scmp.ne.s32.totalorder %s49, %s50
      %p61 = scmp.eq.s32.totalorder %s27, 0
      %p62 = por %p60, %p61
      %p63 = scmp.ne.s32.totalorder %s49, %s50
      %p64 = scmp.eq.s32.totalorder %s28, 1
      %p65 = por %p63, %p64
      %p67 = scmp.ne.s32.totalorder %s50, %s66
      %p68 = scmp.eq.s32.totalorder %s28, 0
      %p69 = por %p67, %p68
      %s71 = sadd.s32 %s70, 1
      %p74 = scmp.eq.s32.totalorder %s22, 1
      %p75 = scmp.ne.s32.totalorder %s70, %s72
      %p76 = scmp.eq.s32.totalorder %s22, 0
      %p77 = por %p75, %p76
      %p78 = scmp.ne.s32.totalorder %s70, %s72
      %p79 = scmp.eq.s32.totalorder %s27, 1
      %p80 = por %p78, %p79
      %p81 = scmp.ne.s32.totalorder %s72, %s73
      %p82 = scmp.eq.s32.totalorder %s27, 0
      %p83 = por %p81, %p82
      %p84 = scmp.ne.s32.totalorder %s72, %s73
      %p85 = scmp.eq.s32.totalorder %s28, 1
      %p86 = por %p84, %p85
      %p88 = scmp.ne.s32.totalorder %s73, %s87
      %p89 = scmp.eq.s32.totalorder %s28, 0
      %p90 = por %p88, %p89
      %s92 = sadd.s32 %s91, 1
      %p95 = scmp.eq.s32.totalorder %s22, 1
      %p96 = scmp.ne.s32.totalorder %s91, %s93
      %p97 = scmp.eq.s32.totalorder %s22, 0
      %p98 = por %p96, %p97
      %p99 = scmp.ne.s32.totalorder %s91, %s93
      %p100 = scmp.eq.s32.totalorder %s27, 1
      %p101 = por %p99, %p100
      %p102 = scmp.ne.s32.totalorder %s93, %s94
      %p103 = scmp.eq.s32.totalorder %s27, 0
      %p104 = por %p102, %p103
      %p105 = scmp.ne.s32.totalorder %s93, %s94
      %p106 = scmp.eq.s32.totalorder %s28, 1
      %p107 = por %p105, %p106
      %p109 = scmp.ne.s32.totalorder %s94, %s108
      %p110 = scmp.eq.s32.totalorder %s28, 0
      %p111 = por %p109, %p110
      %s113 = sadd.s32 %s112, 1
      %p116 = scmp.eq.s32.totalorder %s22, 1
      %p117 = scmp.ne.s32.totalorder %s112, %s114
      %p118 = scmp.eq.s32.totalorder %s22, 0
      %p119 = por %p117, %p118
      %p120 = scmp.ne.s32.totalorder %s112, %s114
      %p121 = scmp.eq.s32.totalorder %s27, 1
      %p122 = por %p120, %p121
      %p123 = scmp.ne.s32.totalorder %s114, %s115
      %p124 = scmp.eq.s32.totalorder %s27, 0
      %p125 = por %p123, %p124
      %p126 = scmp.ne.s32.totalorder %s114, %s115
      %p127 = scmp.eq.s32.totalorder %s28, 1
      %p128 = por %p126, %p127
      %p130 = scmp.ne.s32.totalorder %s115, %s129
      %p131 = scmp.eq.s32.totalorder %s28, 0
      %p132 = por %p130, %p131
      %s134 = sadd.s32 %s133, 1
      %p137 = scmp.eq.s32.totalorder %s22, 1
      %p138 = scmp.ne.s32.totalorder %s133, %s135
      %p139 = scmp.eq.s32.totalorder %s22, 0
      %p140 = por %p138, %p139
      %p141 = scmp.ne.s32.totalorder %s133, %s135
      %p142 = scmp.eq.s32.totalorder %s27, 1
      %p143 = por %p141, %p142
      %p144 = scmp.ne.s32.totalorder %s135, %s136
      %p145 = scmp.eq.s32.totalorder %s27, 0
      %p146 = por %p144, %p145
      %p147 = scmp.ne.s32.totalorder %s135, %s136
      %p148 = scmp.eq.s32.totalorder %s28, 1
      %p149 = por %p147, %p148
      %p151 = scmp.ne.s32.totalorder %s136, %s150
      %p152 = scmp.eq.s32.totalorder %s28, 0
      %p153 = por %p151, %p152
      %s155 = sadd.s32 %s154, 1
      %p158 = scmp.eq.s32.totalorder %s22, 1
      %p159 = scmp.ne.s32.totalorder %s154, %s156
      %p160 = scmp.eq.s32.totalorder %s22, 0
      %p161 = por %p159, %p160
      %p162 = scmp.ne.s32.totalorder %s154, %s156
      %p163 = scmp.eq.s32.totalorder %s27, 1
      %p164 = por %p162, %p163
      %p165 = scmp.ne.s32.totalorder %s156, %s157
      %p166 = scmp.eq.s32.totalorder %s27, 0
      %p167 = por %p165, %p166
      %p168 = scmp.ne.s32.totalorder %s156, %s157
      %p169 = scmp.eq.s32.totalorder %s28, 1
      %p170 = por %p168, %p169
      %p172 = scmp.ne.s32.totalorder %s157, %s171
      %p173 = scmp.eq.s32.totalorder %s28, 0
      %p174 = por %p172, %p173
      %s176 = sadd.s32 %s175, 1
      %p179 = scmp.eq.s32.totalorder %s22, 1
      %p180 = scmp.ne.s32.totalorder %s175, %s177
      %p181 = scmp.eq.s32.totalorder %s22, 0
      %p182 = por %p180, %p181
      %p183 = scmp.ne.s32.totalorder %s175, %s177
      %p184 = scmp.eq.s32.totalorder %s27, 1
      %p185 = por %p183, %p184
      %p186 = scmp.ne.s32.totalorder %s177, %s178
      %p187 = scmp.eq.s32.totalorder %s27, 0
      %p188 = por %p186, %p187
      %p189 = scmp.ne.s32.totalorder %s177, %s178
      %p190 = scmp.eq.s32.totalorder %s28, 1
      %p191 = por %p189, %p190
      %p193 = scmp.ne.s32.totalorder %s178, %s192
      %p194 = scmp.eq.s32.totalorder %s28, 0
      %p195 = por %p193, %p194
      %s197 = sadd.s32 %s196, 1
      %p200 = scmp.eq.s32.totalorder %s22, 1
      %p201 = scmp.ne.s32.totalorder %s196, %s198
      %p202 = scmp.eq.s32.totalorder %s22, 0
      %p203 = por %p201, %p202
      %p204 = scmp.ne.s32.totalorder %s196, %s198
      %p205 = scmp.eq.s32.totalorder %s27, 1
      %p206 = por %p204, %p205
      %p207 = scmp.ne.s32.totalorder %s198, %s199
      %p208 = scmp.eq.s32.totalorder %s27, 0
      %p209 = por %p207, %p208
      %p210 = scmp.ne.s32.totalorder %s198, %s199
      %p211 = scmp.eq.s32.totalorder %s28, 1
      %p212 = por %p210, %p211
      %p214 = scmp.ne.s32.totalorder %s199, %s213
      %p215 = scmp.eq.s32.totalorder %s28, 0
      %p216 = por %p214, %p215
      %s218 = sadd.s32 %s217, 1
      %p221 = scmp.eq.s32.totalorder %s22, 1
      %p222 = scmp.ne.s32.totalorder %s217, %s219
      %p223 = scmp.eq.s32.totalorder %s22, 0
      %p224 = por %p222, %p223
      %p225 = scmp.ne.s32.totalorder %s217, %s219
      %p226 = scmp.eq.s32.totalorder %s27, 1
      %p227 = por %p225, %p226
      %p228 = scmp.ne.s32.totalorder %s219, %s220
      %p229 = scmp.eq.s32.totalorder %s27, 0
      %p230 = por %p228, %p229
      %p231 = scmp.ne.s32.totalorder %s219, %s220
      %p232 = scmp.eq.s32.totalorder %s28, 1
      %p233 = por %p231, %p232
      %p235 = scmp.ne.s32.totalorder %s220, %s234
      %p236 = scmp.eq.s32.totalorder %s28, 0
      %p237 = por %p235, %p236
      %s239 = sadd.s32 %s238, 1
      %p242 = scmp.eq.s32.totalorder %s22, 1
      %p243 = scmp.ne.s32.totalorder %s238, %s240
      %p244 = scmp.eq.s32.totalorder %s22, 0
      %p245 = por %p243, %p244
      %p246 = scmp.ne.s32.totalorder %s238, %s240
      %p247 = scmp.eq.s32.totalorder %s27, 1
      %p248 = por %p246, %p247
      %p249 = scmp.ne.s32.totalorder %s240, %s241
      %p250 = scmp.eq.s32.totalorder %s27, 0
      %p251 = por %p249, %p250
      %p252 = scmp.ne.s32.totalorder %s240, %s241
      %p253 = scmp.eq.s32.totalorder %s28, 1
      %p254 = por %p252, %p253
      %p256 = scmp.ne.s32.totalorder %s241, %s255
      %p257 = scmp.eq.s32.totalorder %s28, 0
      %p258 = por %p256, %p257
      %s260 = sadd.s32 %s259, 1
      %p263 = scmp.eq.s32.totalorder %s22, 1
      %p264 = scmp.ne.s32.totalorder %s259, %s261
      %p265 = scmp.eq.s32.totalorder %s22, 0
      %p266 = por %p264, %p265
      %p267 = scmp.ne.s32.totalorder %s259, %s261
      %p268 = scmp.eq.s32.totalorder %s27, 1
      %p269 = por %p267, %p268
      %p270 = scmp.ne.s32.totalorder %s261, %s262
      %p271 = scmp.eq.s32.totalorder %s27, 0
      %p272 = por %p270, %p271
      %p273 = scmp.ne.s32.totalorder %s261, %s262
      %p274 = scmp.eq.s32.totalorder %s28, 1
      %p275 = por %p273, %p274
      %p277 = scmp.ne.s32.totalorder %s262, %s276
      %p278 = scmp.eq.s32.totalorder %s28, 0
      %p279 = por %p277, %p278
      %s281 = sadd.s32 %s280, 1
      %p284 = scmp.eq.s32.totalorder %s22, 1
      %p285 = scmp.ne.s32.totalorder %s280, %s282
      %p286 = scmp.eq.s32.totalorder %s22, 0
      %p287 = por %p285, %p286
      %p288 = scmp.ne.s32.totalorder %s280, %s282
      %p289 = scmp.eq.s32.totalorder %s27, 1
      %p290 = por %p288, %p289
      %p291 = scmp.ne.s32.totalorder %s282, %s283
      %p292 = scmp.eq.s32.totalorder %s27, 0
      %p293 = por %p291, %p292
      %p294 = scmp.ne.s32.totalorder %s282, %s283
      %p295 = scmp.eq.s32.totalorder %s28, 1
      %p296 = por %p294, %p295
      %p298 = scmp.ne.s32.totalorder %s283, %s297
      %p299 = scmp.eq.s32.totalorder %s28, 0
      %p300 = por %p298, %p299
      %s302 = sadd.s32 %s301, 1
      %p305 = scmp.eq.s32.totalorder %s22, 1
      %p306 = scmp.ne.s32.totalorder %s301, %s303
      %p307 = scmp.eq.s32.totalorder %s22, 0
      %p308 = por %p306, %p307
      %p309 = scmp.ne.s32.totalorder %s301, %s303
      %p310 = scmp.eq.s32.totalorder %s27, 1
      %p311 = por %p309, %p310
      %p312 = scmp.ne.s32.totalorder %s303, %s304
      %p313 = scmp.eq.s32.totalorder %s27, 0
      %p314 = por %p312, %p313
      %p315 = scmp.ne.s32.totalorder %s303, %s304
      %p316 = scmp.eq.s32.totalorder %s28, 1
      %p317 = por %p315, %p316
      %p319 = scmp.ne.s32.totalorder %s304, %s318
      %p320 = scmp.eq.s32.totalorder %s28, 0
      %p321 = por %p319, %p320
      %s322 = ssub.s32 %s29, %s41
      %p323 = scmp.eq.s32.totalorder %s322, 0
      %s325 = sadd.s32 %s324, 1
      %s326 = scalar_select %p323, %s324, %s325
      %p329 = pneg %p323
      %p330 = scmp.eq.s32.totalorder %s22, 1
      %p331 = por %p329, %p330
      %p332 = scmp.ne.s32.totalorder %s324, %s327
      %p333 = scmp.eq.s32.totalorder %s22, 0
      %p334 = por %p332, %p333
      %p335 = scmp.ne.s32.totalorder %s324, %s327
      %p336 = scmp.eq.s32.totalorder %s27, 1
      %p337 = por %p335, %p336
      %p338 = scmp.ne.s32.totalorder %s327, %s328
      %p339 = scmp.eq.s32.totalorder %s27, 0
      %p340 = por %p338, %p339
      %p341 = scmp.ne.s32.totalorder %s327, %s328
      %p342 = scmp.eq.s32.totalorder %s28, 1
      %p343 = por %p341, %p342
      %p345 = scmp.ne.s32.totalorder %s328, %s344
      %p346 = scmp.eq.s32.totalorder %s28, 0
      %p347 = por %p345, %p346
      %p348 = scmp.le.s32.totalorder 1, %s22
      %p349 = scmp.lt.s32.totalorder %s22, 3
      %p350 = pnand %p348, %p349
      %p351 = pneg %p350
      // Predicated region
      $region9: #{tpu_custom_call.1} parent=5 // pred_check
        _
      $region10: #{tpu_custom_call.1} parent=5 // pred_check_branch
        %353 = sbr.rel (%p350) target = $region12
      $region11: #{tpu_custom_call.1} parent=5 // pred_region
        %s354 = ssub.s32 %s22, 1
        // Predicated region
        $region13: #{tpu_custom_call.1} parent=11 // pred_check
          %p355 = pneg %p83
        $region14: #{tpu_custom_call.1} parent=11 // pred_check_branch
          %357 = sbr.rel (%p355) target = $region16
        $region15: #{tpu_custom_call.1} parent=11 // pred_region
          _
        $region16: #{tpu_custom_call.1} parent=11 // pred_fallthru
          _
        // Predicated region
        $region17: #{tpu_custom_call.1} parent=11 // pred_check
          %p358 = pneg %p104
        $region18: #{tpu_custom_call.1} parent=11 // pred_check_branch
          %360 = sbr.rel (%p358) target = $region20
        $region19: #{tpu_custom_call.1} parent=11 // pred_region
          _
        $region20: #{tpu_custom_call.1} parent=11 // pred_fallthru
          _
        // Predicated region
        $region21: #{tpu_custom_call.1} parent=11 // pred_check
          %p361 = pneg %p125
        $region22: #{tpu_custom_call.1} parent=11 // pred_check_branch
          %363 = sbr.rel (%p361) target = $region24
        $region23: #{tpu_custom_call.1} parent=11 // pred_region
          _
        $region24: #{tpu_custom_call.1} parent=11 // pred_fallthru
          _
        // Predicated region
        $region25: #{tpu_custom_call.1} parent=11 // pred_check
          %p364 = pneg %p146
        $region26: #{tpu_custom_call.1} parent=11 // pred_check_branch
          %366 = sbr.rel (%p364) target = $region28
        $region27: #{tpu_custom_call.1} parent=11 // pred_region
          _
        $region28: #{tpu_custom_call.1} parent=11 // pred_fallthru
          _
        // Predicated region
        $region29: #{tpu_custom_call.1} parent=11 // pred_check
          %p367 = pneg %p167
        $region30: #{tpu_custom_call.1} parent=11 // pred_check_branch
          %369 = sbr.rel (%p367) target = $region32
        $region31: #{tpu_custom_call.1} parent=11 // pred_region
          _
        $region32: #{tpu_custom_call.1} parent=11 // pred_fallthru
          _
        // Predicated region
        $region33: #{tpu_custom_call.1} parent=11 // pred_check
          %p370 = pneg %p188
        $region34: #{tpu_custom_call.1} parent=11 // pred_check_branch
          %372 = sbr.rel (%p370) target = $region36
        $region35: #{tpu_custom_call.1} parent=11 // pred_region
          _
        $region36: #{tpu_custom_call.1} parent=11 // pred_fallthru
          _
        // Predicated region
        $region37: #{tpu_custom_call.1} parent=11 // pred_check
          %p373 = pneg %p209
        $region38: #{tpu_custom_call.1} parent=11 // pred_check_branch
          %375 = sbr.rel (%p373) target = $region40
        $region39: #{tpu_custom_call.1} parent=11 // pred_region
          _
        $region40: #{tpu_custom_call.1} parent=11 // pred_fallthru
          _
        // Predicated region
        $region41: #{tpu_custom_call.1} parent=11 // pred_check
          %p376 = pneg %p230
        $region42: #{tpu_custom_call.1} parent=11 // pred_check_branch
          %378 = sbr.rel (%p376) target = $region44
        $region43: #{tpu_custom_call.1} parent=11 // pred_region
          _
        $region44: #{tpu_custom_call.1} parent=11 // pred_fallthru
          _
        // Predicated region
        $region45: #{tpu_custom_call.1} parent=11 // pred_check
          %p379 = pneg %p251
        $region46: #{tpu_custom_call.1} parent=11 // pred_check_branch
          %381 = sbr.rel (%p379) target = $region48
        $region47: #{tpu_custom_call.1} parent=11 // pred_region
          _
        $region48: #{tpu_custom_call.1} parent=11 // pred_fallthru
          _
        // Predicated region
        $region49: #{tpu_custom_call.1} parent=11 // pred_check
          %p382 = pneg %p272
        $region50: #{tpu_custom_call.1} parent=11 // pred_check_branch
          %384 = sbr.rel (%p382) target = $region52
        $region51: #{tpu_custom_call.1} parent=11 // pred_region
          _
        $region52: #{tpu_custom_call.1} parent=11 // pred_fallthru
          _
        // Predicated region
        $region53: #{tpu_custom_call.1} parent=11 // pred_check
          %p385 = pneg %p293
        $region54: #{tpu_custom_call.1} parent=11 // pred_check_branch
          %387 = sbr.rel (%p385) target = $region56
        $region55: #{tpu_custom_call.1} parent=11 // pred_region
          _
        $region56: #{tpu_custom_call.1} parent=11 // pred_fallthru
          _
        // Predicated region
        $region57: #{tpu_custom_call.1} parent=11 // pred_check
          %p388 = pneg %p314
        $region58: #{tpu_custom_call.1} parent=11 // pred_check_branch
          %390 = sbr.rel (%p388) target = $region60
        $region59: #{tpu_custom_call.1} parent=11 // pred_region
          _
        $region60: #{tpu_custom_call.1} parent=11 // pred_fallthru
          _
      $region12: #{tpu_custom_call.1} parent=5 // pred_fallthru
        _
      %p391 = scmp.lt.s32.totalorder %s22, 2
      // Predicated region
      $region61: #{tpu_custom_call.1} parent=5 // pred_check
        %p392 = pneg %p391
      $region62: #{tpu_custom_call.1} parent=5 // pred_check_branch
        %394 = sbr.rel (%p392) target = $region64
      $region63: #{tpu_custom_call.1} parent=5 // pred_region
        // Predicated region
        $region65: #{tpu_custom_call.1} parent=63 // pred_check
          %p395 = pneg %p56
        $region66: #{tpu_custom_call.1} parent=63 // pred_check_branch
          %397 = sbr.rel (%p395) target = $region68
        $region67: #{tpu_custom_call.1} parent=63 // pred_region
          %p398 = scmp.lt.s32.totalorder %s29, 1
          %s399 = scalar_select %p398, %s29, 1
          %p400 = scmp.lt.s32.totalorder %s30, 0
          %s401 = scalar_select %p400, %s30, 0
          %s402 = sadd.s32 %s401, %s399
          %s403 = smul.addr %s402, 4
          %s404 = scalar_lea.vmem %s0, %s403
        $region68: #{tpu_custom_call.1} parent=63 // pred_fallthru
          _
      $region64: #{tpu_custom_call.1} parent=5 // pred_fallthru
        _
      %p405 = scmp.le.s32.totalorder 1, %s22
      %p406 = scmp.lt.s32.totalorder %s22, 3
      %p407 = pnand %p405, %p406
      %p408 = pneg %p407
      // Predicated region
      $region69: #{tpu_custom_call.1} parent=5 // pred_check
        _
      $region70: #{tpu_custom_call.1} parent=5 // pred_check_branch
        %410 = sbr.rel (%p407) target = $region72
      $region71: #{tpu_custom_call.1} parent=5 // pred_region
        %s411 = ssub.s32 %s22, 1
        %p412 = scmp.lt.s32.totalorder %s31, 1
        %s413 = scalar_select %p412, %s31, 1
        %p414 = scmp.lt.s32.totalorder %s32, 0
        %s415 = scalar_select %p414, %s32, 0
        %s416 = sadd.s32 %s415, %s413
        %s417 = smul.addr %s416, 4
        %s418 = scalar_lea.vmem %s0, %s417
        %p419 = pneg %p62
        %p420 = pneg %p59
        %p421 = pneg %p83
        %p422 = pneg %p80
        %p423 = pneg %p104
        %p424 = pneg %p101
        %p425 = pneg %p125
        %p426 = pneg %p122
        %p427 = pneg %p146
        %p428 = pneg %p143
        %p429 = pneg %p167
        %p430 = pneg %p164
        %p431 = pneg %p188
        %p432 = pneg %p185
        %p433 = pneg %p209
        %p434 = pneg %p206
        %p435 = pneg %p230
        %p436 = pneg %p227
        %p437 = pneg %p251
        %p438 = pneg %p248
        %p439 = pneg %p272
        %p440 = pneg %p269
        %p441 = pneg %p293
        %p442 = pneg %p290
        %p443 = pneg %p314
        %p444 = pneg %p311
        %p445 = pneg %p340
        %p446 = pneg %p337
        %s447 = sand.u32 %s327, 1
        %s448 = scalar_lea.sflag [#allocation4], %s447
        %s449 = sand.u32 %s327, 1
        %s450 = scalar_lea.vmem [#allocation3], %s449
        %p451 = scmp.lt.s32.totalorder %s31, 1
        %s452 = scalar_select %p451, %s31, 1
        %p453 = scmp.lt.s32.totalorder %s32, 0
        %s454 = scalar_select %p453, %s32, 0
        %s455 = sadd.s32 %s454, %s452
        %s456 = smul.addr %s455, 4
        %s457 = scalar_lea.vmem %s0, %s456
        %p459 = scmp.eq.s32.totalorder %s32, 0
        // Predicated region
        $region73: #{tpu_custom_call.1} parent=71 // pred_check
          %p460 = pneg %p459
        $region74: #{tpu_custom_call.1} parent=71 // pred_check_branch
          %462 = sbr.rel (%p460) target = $region76
        $region75: #{tpu_custom_call.1} parent=71 // pred_region
          %463 = vst [vmem:[#allocation2] sm:$0xff] -inf
          %464 = vst [vmem:[#allocation2 + $0x8] sm:$0xff] -inf
          %465 = vst [vmem:[#allocation2 + $0x10] sm:$0xff] -inf
          %466 = vst [vmem:[#allocation2 + $0x18] sm:$0xff] -inf
          %467 = vst [vmem:[#allocation2 + $0x20] sm:$0xff] -inf
          %468 = vst [vmem:[#allocation2 + $0x28] sm:$0xff] -inf
          %469 = vst [vmem:[#allocation2 + $0x30] sm:$0xff] -inf
          %470 = vst [vmem:[#allocation2 + $0x38] sm:$0xff] -inf
          %471 = vst [vmem:[#allocation2 + $0x40] sm:$0xff] -inf
          %472 = vst [vmem:[#allocation2 + $0x48] sm:$0xff] -inf
          %473 = vst [vmem:[#allocation2 + $0x50] sm:$0xff] -inf
          %474 = vst [vmem:[#allocation2 + $0x58] sm:$0xff] -inf
          %475 = vst [vmem:[#allocation2 + $0x60] sm:$0xff] -inf
          %476 = vst [vmem:[#allocation2 + $0x68] sm:$0xff] -inf
          %477 = vst [vmem:[#allocation2 + $0x70] sm:$0xff] -inf
          %478 = vst [vmem:[#allocation2 + $0x78] sm:$0xff] -inf
          %479 = vst [vmem:[#allocation2 + $0x80] sm:$0xff] -inf
          %480 = vst [vmem:[#allocation2 + $0x88] sm:$0xff] -inf
          %481 = vst [vmem:[#allocation2 + $0x90] sm:$0xff] -inf
          %482 = vst [vmem:[#allocation2 + $0x98] sm:$0xff] -inf
          %483 = vst [vmem:[#allocation2 + $0xa0] sm:$0xff] -inf
          %484 = vst [vmem:[#allocation2 + $0xa8] sm:$0xff] -inf
          %485 = vst [vmem:[#allocation2 + $0xb0] sm:$0xff] -inf
          %486 = vst [vmem:[#allocation2 + $0xb8] sm:$0xff] -inf
          %487 = vst [vmem:[#allocation2 + $0xc0] sm:$0xff] -inf
          %488 = vst [vmem:[#allocation2 + $0xc8] sm:$0xff] -inf
          %489 = vst [vmem:[#allocation2 + $0xd0] sm:$0xff] -inf
          %490 = vst [vmem:[#allocation2 + $0xd8] sm:$0xff] -inf
          %491 = vst [vmem:[#allocation2 + $0xe0] sm:$0xff] -inf
          %492 = vst [vmem:[#allocation2 + $0xe8] sm:$0xff] -inf
          %493 = vst [vmem:[#allocation2 + $0xf0] sm:$0xff] -inf
          %494 = vst [vmem:[#allocation2 + $0xf8] sm:$0xff] -inf
        $region76: #{tpu_custom_call.1} parent=71 // pred_fallthru
          _
        %v495 = vld [vmem:[%s1] sm:$0xff]
        %v496 = vld [vmem:[%s1 + $0x8] sm:$0xff]
        %v497 = vld [vmem:[%s1 + $0x10] sm:$0xff]
        %v498 = vld [vmem:[%s1 + $0x18] sm:$0xff]
        %v499 = vld [vmem:[%s1 + $0x20] sm:$0xff]
        %v500 = vld [vmem:[%s1 + $0x28] sm:$0xff]
        %v501 = vld [vmem:[%s1 + $0x30] sm:$0xff]
        %v502 = vld [vmem:[%s1 + $0x38] sm:$0xff]
        %v503 = vld [vmem:[%s1 + $0x40] sm:$0xff]
        %v504 = vld [vmem:[%s1 + $0x48] sm:$0xff]
        %v505 = vld [vmem:[%s1 + $0x50] sm:$0xff]
        %v506 = vld [vmem:[%s1 + $0x58] sm:$0xff]
        %v507 = vld [vmem:[%s1 + $0x60] sm:$0xff]
        %v508 = vld [vmem:[%s1 + $0x68] sm:$0xff]
        %v509 = vld [vmem:[%s1 + $0x70] sm:$0xff]
        %v510 = vld [vmem:[%s1 + $0x78] sm:$0xff]
        %512 = vset.pattern.permute.xlu0 0
        %513 = vperm.xlu0 %512, %v495
        %v514 = vpop.permute.xlu0 %513
        %517 = vset.pattern.permute.xlu0 0
        %518 = vperm.xlu0 %517, %v496
        %v519 = vpop.permute.xlu0 %518
        %522 = vset.pattern.permute.xlu0 0
        %523 = vperm.xlu0 %522, %v497
        %v524 = vpop.permute.xlu0 %523
        %527 = vset.pattern.permute.xlu0 0
        %528 = vperm.xlu0 %527, %v498
        %v529 = vpop.permute.xlu0 %528
        %532 = vset.pattern.permute.xlu0 0
        %533 = vperm.xlu0 %532, %v499
        %v534 = vpop.permute.xlu0 %533
        %537 = vset.pattern.permute.xlu0 0
        %538 = vperm.xlu0 %537, %v500
        %v539 = vpop.permute.xlu0 %538
        %542 = vset.pattern.permute.xlu0 0
        %543 = vperm.xlu0 %542, %v501
        %v544 = vpop.permute.xlu0 %543
        %547 = vset.pattern.permute.xlu0 0
        %548 = vperm.xlu0 %547, %v502
        %v549 = vpop.permute.xlu0 %548
        %552 = vset.pattern.permute.xlu0 0
        %553 = vperm.xlu0 %552, %v503
        %v554 = vpop.permute.xlu0 %553
        %557 = vset.pattern.permute.xlu0 0
        %558 = vperm.xlu0 %557, %v504
        %v559 = vpop.permute.xlu0 %558
        %562 = vset.pattern.permute.xlu0 0
        %563 = vperm.xlu0 %562, %v505
        %v564 = vpop.permute.xlu0 %563
        %567 = vset.pattern.permute.xlu0 0
        %568 = vperm.xlu0 %567, %v506
        %v569 = vpop.permute.xlu0 %568
        %572 = vset.pattern.permute.xlu0 0
        %573 = vperm.xlu0 %572, %v507
        %v574 = vpop.permute.xlu0 %573
        %577 = vset.pattern.permute.xlu0 0
        %578 = vperm.xlu0 %577, %v508
        %v579 = vpop.permute.xlu0 %578
        %582 = vset.pattern.permute.xlu0 0
        %583 = vperm.xlu0 %582, %v509
        %v584 = vpop.permute.xlu0 %583
        %587 = vset.pattern.permute.xlu0 0
        %588 = vperm.xlu0 %587, %v510
        %v589 = vpop.permute.xlu0 %588
        %591 = vset.pattern.permute.xlu0 1
        %592 = vperm.xlu0 %591, %v495
        %v593 = vpop.permute.xlu0 %592
        %595 = vset.pattern.permute.xlu0 1
        %596 = vperm.xlu0 %595, %v496
        %v597 = vpop.permute.xlu0 %596
        %599 = vset.pattern.permute.xlu0 1
        %600 = vperm.xlu0 %599, %v497
        %v601 = vpop.permute.xlu0 %600
        %603 = vset.pattern.permute.xlu0 1
        %604 = vperm.xlu0 %603, %v498
        %v605 = vpop.permute.xlu0 %604
        %607 = vset.pattern.permute.xlu0 1
        %608 = vperm.xlu0 %607, %v499
        %v609 = vpop.permute.xlu0 %608
        %611 = vset.pattern.permute.xlu0 1
        %612 = vperm.xlu0 %611, %v500
        %v613 = vpop.permute.xlu0 %612
        %615 = vset.pattern.permute.xlu0 1
        %616 = vperm.xlu0 %615, %v501
        %v617 = vpop.permute.xlu0 %616
        %619 = vset.pattern.permute.xlu0 1
        %620 = vperm.xlu0 %619, %v502
        %v621 = vpop.permute.xlu0 %620
        %623 = vset.pattern.permute.xlu0 1
        %624 = vperm.xlu0 %623, %v503
        %v625 = vpop.permute.xlu0 %624
        %627 = vset.pattern.permute.xlu0 1
        %628 = vperm.xlu0 %627, %v504
        %v629 = vpop.permute.xlu0 %628
        %631 = vset.pattern.permute.xlu0 1
        %632 = vperm.xlu0 %631, %v505
        %v633 = vpop.permute.xlu0 %632
        %635 = vset.pattern.permute.xlu0 1
        %636 = vperm.xlu0 %635, %v506
        %v637 = vpop.permute.xlu0 %636
        %639 = vset.pattern.permute.xlu0 1
        %640 = vperm.xlu0 %639, %v507
        %v641 = vpop.permute.xlu0 %640
        %643 = vset.pattern.permute.xlu0 1
        %644 = vperm.xlu0 %643, %v508
        %v645 = vpop.permute.xlu0 %644
        %647 = vset.pattern.permute.xlu0 1
        %648 = vperm.xlu0 %647, %v509
        %v649 = vpop.permute.xlu0 %648
        %651 = vset.pattern.permute.xlu0 1
        %652 = vperm.xlu0 %651, %v510
        %v653 = vpop.permute.xlu0 %652
        %655 = vset.pattern.permute.xlu0 2
        %656 = vperm.xlu0 %655, %v495
        %v657 = vpop.permute.xlu0 %656
        %659 = vset.pattern.permute.xlu0 2
        %660 = vperm.xlu0 %659, %v496
        %v661 = vpop.permute.xlu0 %660
        %663 = vset.pattern.permute.xlu0 2
        %664 = vperm.xlu0 %663, %v497
        %v665 = vpop.permute.xlu0 %664
        %667 = vset.pattern.permute.xlu0 2
        %668 = vperm.xlu0 %667, %v498
        %v669 = vpop.permute.xlu0 %668
        %671 = vset.pattern.permute.xlu0 2
        %672 = vperm.xlu0 %671, %v499
        %v673 = vpop.permute.xlu0 %672
        %675 = vset.pattern.permute.xlu0 2
        %676 = vperm.xlu0 %675, %v500
        %v677 = vpop.permute.xlu0 %676
        %679 = vset.pattern.permute.xlu0 2
        %680 = vperm.xlu0 %679, %v501
        %v681 = vpop.permute.xlu0 %680
        %683 = vset.pattern.permute.xlu0 2
        %684 = vperm.xlu0 %683, %v502
        %v685 = vpop.permute.xlu0 %684
        %687 = vset.pattern.permute.xlu0 2
        %688 = vperm.xlu0 %687, %v503
        %v689 = vpop.permute.xlu0 %688
        %691 = vset.pattern.permute.xlu0 2
        %692 = vperm.xlu0 %691, %v504
        %v693 = vpop.permute.xlu0 %692
        %695 = vset.pattern.permute.xlu0 2
        %696 = vperm.xlu0 %695, %v505
        %v697 = vpop.permute.xlu0 %696
        %699 = vset.pattern.permute.xlu0 2
        %700 = vperm.xlu0 %699, %v506
        %v701 = vpop.permute.xlu0 %700
        %703 = vset.pattern.permute.xlu0 2
        %704 = vperm.xlu0 %703, %v507
        %v705 = vpop.permute.xlu0 %704
        %707 = vset.pattern.permute.xlu0 2
        %708 = vperm.xlu0 %707, %v508
        %v709 = vpop.permute.xlu0 %708
        %711 = vset.pattern.permute.xlu0 2
        %712 = vperm.xlu0 %711, %v509
        %v713 = vpop.permute.xlu0 %712
        %715 = vset.pattern.permute.xlu0 2
        %716 = vperm.xlu0 %715, %v510
        %v717 = vpop.permute.xlu0 %716
        %v719 = vld [vmem:[%s2] sm:$0xff]
        %v720 = vld [vmem:[%s2 + $0x8] sm:$0xff]
        %v721 = vld [vmem:[%s2 + $0x10] sm:$0xff]
        %v722 = vld [vmem:[%s2 + $0x18] sm:$0xff]
        %v723 = vld [vmem:[%s2 + $0x20] sm:$0xff]
        %v724 = vld [vmem:[%s2 + $0x28] sm:$0xff]
        %v725 = vld [vmem:[%s2 + $0x30] sm:$0xff]
        %v726 = vld [vmem:[%s2 + $0x38] sm:$0xff]
        %v727 = vld [vmem:[%s2 + $0x40] sm:$0xff]
        %v728 = vld [vmem:[%s2 + $0x48] sm:$0xff]
        %v729 = vld [vmem:[%s2 + $0x50] sm:$0xff]
        %v730 = vld [vmem:[%s2 + $0x58] sm:$0xff]
        %v731 = vld [vmem:[%s2 + $0x60] sm:$0xff]
        %v732 = vld [vmem:[%s2 + $0x68] sm:$0xff]
        %v733 = vld [vmem:[%s2 + $0x70] sm:$0xff]
        %v734 = vld [vmem:[%s2 + $0x78] sm:$0xff]
        %736 = vset.pattern.permute.xlu0 0
        %737 = vperm.xlu0 %736, %v719
        %v738 = vpop.permute.xlu0 %737
        %741 = vset.pattern.permute.xlu0 0
        %742 = vperm.xlu0 %741, %v720
        %v743 = vpop.permute.xlu0 %742
        %746 = vset.pattern.permute.xlu0 0
        %747 = vperm.xlu0 %746, %v721
        %v748 = vpop.permute.xlu0 %747
        %751 = vset.pattern.permute.xlu0 0
        %752 = vperm.xlu0 %751, %v722
        %v753 = vpop.permute.xlu0 %752
        %756 = vset.pattern.permute.xlu0 0
        %757 = vperm.xlu0 %756, %v723
        %v758 = vpop.permute.xlu0 %757
        %761 = vset.pattern.permute.xlu0 0
        %762 = vperm.xlu0 %761, %v724
        %v763 = vpop.permute.xlu0 %762
        %766 = vset.pattern.permute.xlu0 0
        %767 = vperm.xlu0 %766, %v725
        %v768 = vpop.permute.xlu0 %767
        %771 = vset.pattern.permute.xlu0 0
        %772 = vperm.xlu0 %771, %v726
        %v773 = vpop.permute.xlu0 %772
        %776 = vset.pattern.permute.xlu0 0
        %777 = vperm.xlu0 %776, %v727
        %v778 = vpop.permute.xlu0 %777
        %781 = vset.pattern.permute.xlu0 0
        %782 = vperm.xlu0 %781, %v728
        %v783 = vpop.permute.xlu0 %782
        %786 = vset.pattern.permute.xlu0 0
        %787 = vperm.xlu0 %786, %v729
        %v788 = vpop.permute.xlu0 %787
        %791 = vset.pattern.permute.xlu0 0
        %792 = vperm.xlu0 %791, %v730
        %v793 = vpop.permute.xlu0 %792
        %796 = vset.pattern.permute.xlu0 0
        %797 = vperm.xlu0 %796, %v731
        %v798 = vpop.permute.xlu0 %797
        %801 = vset.pattern.permute.xlu0 0
        %802 = vperm.xlu0 %801, %v732
        %v803 = vpop.permute.xlu0 %802
        %806 = vset.pattern.permute.xlu0 0
        %807 = vperm.xlu0 %806, %v733
        %v808 = vpop.permute.xlu0 %807
        %811 = vset.pattern.permute.xlu0 0
        %812 = vperm.xlu0 %811, %v734
        %v813 = vpop.permute.xlu0 %812
        %v815 = vld [vmem:[%s457] sm:$0x7]
        %v816 = vlaneseq
        %v817 = vshrl.u32 %v816, 7
        %v818 = vsub.s32 0, %v817
        %v819 = vrot.slane %v815, %v818
        %v820 = vmul.f32 %v514, %v819
        %v821 = vmul.f32 %v519, %v819
        %v822 = vmul.f32 %v524, %v819
        %v823 = vmul.f32 %v529, %v819
        %v824 = vmul.f32 %v534, %v819
        %v825 = vmul.f32 %v539, %v819
        %v826 = vmul.f32 %v544, %v819
        %v827 = vmul.f32 %v549, %v819
        %v828 = vmul.f32 %v554, %v819
        %v829 = vmul.f32 %v559, %v819
        %v830 = vmul.f32 %v564, %v819
        %v831 = vmul.f32 %v569, %v819
        %v832 = vmul.f32 %v574, %v819
        %v833 = vmul.f32 %v579, %v819
        %v834 = vmul.f32 %v584, %v819
        %v835 = vmul.f32 %v589, %v819
        %v836 = vlaneseq
        %v837 = vshrl.u32 %v836, 7
        %v838 = vsub.s32 1, %v837
        %v839 = vrot.slane %v815, %v838
        %v840 = vmul.f32 %v593, %v839
        %v841 = vmul.f32 %v597, %v839
        %v842 = vmul.f32 %v601, %v839
        %v843 = vmul.f32 %v605, %v839
        %v844 = vmul.f32 %v609, %v839
        %v845 = vmul.f32 %v613, %v839
        %v846 = vmul.f32 %v617, %v839
        %v847 = vmul.f32 %v621, %v839
        %v848 = vmul.f32 %v625, %v839
        %v849 = vmul.f32 %v629, %v839
        %v850 = vmul.f32 %v633, %v839
        %v851 = vmul.f32 %v637, %v839
        %v852 = vmul.f32 %v641, %v839
        %v853 = vmul.f32 %v645, %v839
        %v854 = vmul.f32 %v649, %v839
        %v855 = vmul.f32 %v653, %v839
        %v856 = vadd.f32 %v820, %v840
        %v857 = vadd.f32 %v821, %v841
        %v858 = vadd.f32 %v822, %v842
        %v859 = vadd.f32 %v823, %v843
        %v860 = vadd.f32 %v824, %v844
        %v861 = vadd.f32 %v825, %v845
        %v862 = vadd.f32 %v826, %v846
        %v863 = vadd.f32 %v827, %v847
        %v864 = vadd.f32 %v828, %v848
        %v865 = vadd.f32 %v829, %v849
        %v866 = vadd.f32 %v830, %v850
        %v867 = vadd.f32 %v831, %v851
        %v868 = vadd.f32 %v832, %v852
        %v869 = vadd.f32 %v833, %v853
        %v870 = vadd.f32 %v834, %v854
        %v871 = vadd.f32 %v835, %v855
        %v872 = vlaneseq
        %v873 = vshrl.u32 %v872, 7
        %v874 = vsub.s32 2, %v873
        %v875 = vrot.slane %v815, %v874
        %v876 = vmul.f32 %v657, %v875
        %v877 = vmul.f32 %v661, %v875
        %v878 = vmul.f32 %v665, %v875
        %v879 = vmul.f32 %v669, %v875
        %v880 = vmul.f32 %v673, %v875
        %v881 = vmul.f32 %v677, %v875
        %v882 = vmul.f32 %v681, %v875
        %v883 = vmul.f32 %v685, %v875
        %v884 = vmul.f32 %v689, %v875
        %v885 = vmul.f32 %v693, %v875
        %v886 = vmul.f32 %v697, %v875
        %v887 = vmul.f32 %v701, %v875
        %v888 = vmul.f32 %v705, %v875
        %v889 = vmul.f32 %v709, %v875
        %v890 = vmul.f32 %v713, %v875
        %v891 = vmul.f32 %v717, %v875
        %v892 = vadd.f32 %v856, %v876
        %v893 = vadd.f32 %v857, %v877
        %v894 = vadd.f32 %v858, %v878
        %v895 = vadd.f32 %v859, %v879
        %v896 = vadd.f32 %v860, %v880
        %v897 = vadd.f32 %v861, %v881
        %v898 = vadd.f32 %v862, %v882
        %v899 = vadd.f32 %v863, %v883
        %v900 = vadd.f32 %v864, %v884
        %v901 = vadd.f32 %v865, %v885
        %v902 = vadd.f32 %v866, %v886
        %v903 = vadd.f32 %v867, %v887
        %v904 = vadd.f32 %v868, %v888
        %v905 = vadd.f32 %v869, %v889
        %v906 = vadd.f32 %v870, %v890
        %v907 = vadd.f32 %v871, %v891
        %v908 = vadd.f32 %v892, %v738
        %v909 = vadd.f32 %v893, %v743
        %v910 = vadd.f32 %v894, %v748
        %v911 = vadd.f32 %v895, %v753
        %v912 = vadd.f32 %v896, %v758
        %v913 = vadd.f32 %v897, %v763
        %v914 = vadd.f32 %v898, %v768
        %v915 = vadd.f32 %v899, %v773
        %v916 = vadd.f32 %v900, %v778
        %v917 = vadd.f32 %v901, %v783
        %v918 = vadd.f32 %v902, %v788
        %v919 = vadd.f32 %v903, %v793
        %v920 = vadd.f32 %v904, %v798
        %v921 = vadd.f32 %v905, %v803
        %v922 = vadd.f32 %v906, %v808
        %v923 = vadd.f32 %v907, %v813
        %v924 = vmax.f32 %v908, 0.0
        %v925 = vmax.f32 %v909, 0.0
        %v926 = vmax.f32 %v910, 0.0
        %v927 = vmax.f32 %v911, 0.0
        %v928 = vmax.f32 %v912, 0.0
        %v929 = vmax.f32 %v913, 0.0
        %v930 = vmax.f32 %v914, 0.0
        %v931 = vmax.f32 %v915, 0.0
        %v932 = vmax.f32 %v916, 0.0
        %v933 = vmax.f32 %v917, 0.0
        %v934 = vmax.f32 %v918, 0.0
        %v935 = vmax.f32 %v919, 0.0
        %v936 = vmax.f32 %v920, 0.0
        %v937 = vmax.f32 %v921, 0.0
        %v938 = vmax.f32 %v922, 0.0
        %v939 = vmax.f32 %v923, 0.0
        %v940 = vld [vmem:[%s3] sm:$0xf]
        %v941 = vld [vmem:[%s3 + $0x4] sm:$0xf]
        %v942 = vld [vmem:[%s3 + $0x8] sm:$0xf]
        %v943 = vld [vmem:[%s3 + $0xc] sm:$0xf]
        %v944 = vld [vmem:[%s3 + $0x10] sm:$0xf]
        %v945 = vld [vmem:[%s3 + $0x14] sm:$0xf]
        %v946 = vld [vmem:[%s3 + $0x18] sm:$0xf]
        %v947 = vld [vmem:[%s3 + $0x1c] sm:$0xf]
        %v948 = vld [vmem:[%s3 + $0x20] sm:$0xf]
        %v949 = vld [vmem:[%s3 + $0x24] sm:$0xf]
        %v950 = vld [vmem:[%s3 + $0x28] sm:$0xf]
        %v951 = vld [vmem:[%s3 + $0x2c] sm:$0xf]
        %v952 = vld [vmem:[%s3 + $0x30] sm:$0xf]
        %v953 = vld [vmem:[%s3 + $0x34] sm:$0xf]
        %v954 = vld [vmem:[%s3 + $0x38] sm:$0xf]
        %v955 = vld [vmem:[%s3 + $0x3c] sm:$0xf]
        %v956 = vpack.c.bf16 %v925, %v924
        %v957 = vpack.c.bf16 %v927, %v926
        %v958 = vpack.c.bf16 %v929, %v928
        %v959 = vpack.c.bf16 %v931, %v930
        %v960 = vpack.c.bf16 %v933, %v932
        %v961 = vpack.c.bf16 %v935, %v934
        %v962 = vpack.c.bf16 %v937, %v936
        %v963 = vpack.c.bf16 %v939, %v938
        %v964 = vld [vmem:[%s4] sm:$0xff]
        %v965 = vld [vmem:[%s4 + $0x8] sm:$0xff]
        %v966 = vld [vmem:[%s4 + $0x10] sm:$0xff]
        %v967 = vld [vmem:[%s4 + $0x18] sm:$0xff]
        %v968 = vld [vmem:[%s4 + $0x20] sm:$0xff]
        %v969 = vld [vmem:[%s4 + $0x28] sm:$0xff]
        %v970 = vld [vmem:[%s4 + $0x30] sm:$0xff]
        %v971 = vld [vmem:[%s4 + $0x38] sm:$0xff]
        %v972 = vld [vmem:[%s4 + $0x40] sm:$0xff]
        %v973 = vld [vmem:[%s4 + $0x48] sm:$0xff]
        %v974 = vld [vmem:[%s4 + $0x50] sm:$0xff]
        %v975 = vld [vmem:[%s4 + $0x58] sm:$0xff]
        %v976 = vld [vmem:[%s4 + $0x60] sm:$0xff]
        %v977 = vld [vmem:[%s4 + $0x68] sm:$0xff]
        %v978 = vld [vmem:[%s4 + $0x70] sm:$0xff]
        %v979 = vld [vmem:[%s4 + $0x78] sm:$0xff]
        %981 = vset.pattern.permute.xlu0 0
        %982 = vperm.xlu0 %981, %v964
        %v983 = vpop.permute.xlu0 %982
        %986 = vset.pattern.permute.xlu0 0
        %987 = vperm.xlu0 %986, %v965
        %v988 = vpop.permute.xlu0 %987
        %991 = vset.pattern.permute.xlu0 0
        %992 = vperm.xlu0 %991, %v966
        %v993 = vpop.permute.xlu0 %992
        %996 = vset.pattern.permute.xlu0 0
        %997 = vperm.xlu0 %996, %v967
        %v998 = vpop.permute.xlu0 %997
        %1001 = vset.pattern.permute.xlu0 0
        %1002 = vperm.xlu0 %1001, %v968
        %v1003 = vpop.permute.xlu0 %1002
        %1006 = vset.pattern.permute.xlu0 0
        %1007 = vperm.xlu0 %1006, %v969
        %v1008 = vpop.permute.xlu0 %1007
        %1011 = vset.pattern.permute.xlu0 0
        %1012 = vperm.xlu0 %1011, %v970
        %v1013 = vpop.permute.xlu0 %1012
        %1016 = vset.pattern.permute.xlu0 0
        %1017 = vperm.xlu0 %1016, %v971
        %v1018 = vpop.permute.xlu0 %1017
        %1021 = vset.pattern.permute.xlu0 0
        %1022 = vperm.xlu0 %1021, %v972
        %v1023 = vpop.permute.xlu0 %1022
        %1026 = vset.pattern.permute.xlu0 0
        %1027 = vperm.xlu0 %1026, %v973
        %v1028 = vpop.permute.xlu0 %1027
        %1031 = vset.pattern.permute.xlu0 0
        %1032 = vperm.xlu0 %1031, %v974
        %v1033 = vpop.permute.xlu0 %1032
        %1036 = vset.pattern.permute.xlu0 0
        %1037 = vperm.xlu0 %1036, %v975
        %v1038 = vpop.permute.xlu0 %1037
        %1041 = vset.pattern.permute.xlu0 0
        %1042 = vperm.xlu0 %1041, %v976
        %v1043 = vpop.permute.xlu0 %1042
        %1046 = vset.pattern.permute.xlu0 0
        %1047 = vperm.xlu0 %1046, %v977
        %v1048 = vpop.permute.xlu0 %1047
        %1051 = vset.pattern.permute.xlu0 0
        %1052 = vperm.xlu0 %1051, %v978
        %v1053 = vpop.permute.xlu0 %1052
        %1056 = vset.pattern.permute.xlu0 0
        %1057 = vperm.xlu0 %1056, %v979
        %v1058 = vpop.permute.xlu0 %1057
        %v1076 = vunpack.c.l.b16 %v940
        %v1077 = vunpack.c.l.b16 %v941
        %v1078 = vunpack.c.l.b16 %v942
        %v1079 = vunpack.c.l.b16 %v943
        %v1080 = vunpack.c.l.b16 %v944
        %v1081 = vunpack.c.l.b16 %v945
        %v1082 = vunpack.c.l.b16 %v946
        %v1083 = vunpack.c.l.b16 %v947
        %v1084 = vunpack.c.l.b16 %v948
        %v1085 = vunpack.c.l.b16 %v949
        %v1086 = vunpack.c.l.b16 %v950
        %v1087 = vunpack.c.l.b16 %v951
        %v1088 = vunpack.c.l.b16 %v952
        %v1089 = vunpack.c.l.b16 %v953
        %v1090 = vunpack.c.l.b16 %v954
        %v1091 = vunpack.c.l.b16 %v955
        %v1092 = vpack.c.b16 %v1077, %v1076
        %v1093 = vpack.c.b16 %v1079, %v1078
        %v1094 = vpack.c.b16 %v1081, %v1080
        %v1095 = vpack.c.b16 %v1083, %v1082
        %v1096 = vpack.c.b16 %v1085, %v1084
        %v1097 = vpack.c.b16 %v1087, %v1086
        %v1098 = vpack.c.b16 %v1089, %v1088
        %v1099 = vpack.c.b16 %v1091, %v1090
        %1108 = vmatprep.subr.bf16.mxu0 0
        %1109 = vmatpush1.bf16.msra.mxu0 %v956
        %1110 = vmatprep.subr.bf16.mxu0 0
        %1111 = vmatpush1.bf16.msra.mxu0 %v957
        %1112 = vmatprep.subr.bf16.mxu0 0
        %1113 = vmatpush1.bf16.msra.mxu0 %v958
        %1114 = vmatprep.subr.bf16.mxu0 0
        %1115 = vmatpush1.bf16.msra.mxu0 %v959
        %1116 = vmatprep.subr.bf16.mxu0 0
        %1117 = vmatpush1.bf16.msra.mxu0 %v960
        %1118 = vmatprep.subr.bf16.mxu0 0
        %1119 = vmatpush1.bf16.msra.mxu0 %v961
        %1120 = vmatprep.subr.bf16.mxu0 0
        %1121 = vmatpush1.bf16.msra.mxu0 %v962
        %1122 = vmatprep.subr.bf16.mxu0 0
        %1123 = vmatpush1.bf16.msra.mxu0 %v963
        %1124 = vmatprep.subr.bf16.mxu0 0
        %1125 = vmatpush1.bf16.msra.mxu0 0
        %1126 = vmatprep.subr.bf16.mxu0 0
        %1127 = vmatpush1.bf16.msra.mxu0 0
        %1128 = vmatprep.subr.bf16.mxu0 0
        %1129 = vmatpush1.bf16.msra.mxu0 0
        %1130 = vmatprep.subr.bf16.mxu0 0
        %1131 = vmatpush1.bf16.msra.mxu0 0
        %1132 = vmatprep.subr.bf16.mxu0 0
        %1133 = vmatpush1.bf16.msra.mxu0 0
        %1134 = vmatprep.subr.bf16.mxu0 0
        %1135 = vmatpush1.bf16.msra.mxu0 0
        %1136 = vmatprep.subr.bf16.mxu0 0
        %1137 = vmatpush1.bf16.msra.mxu0 0
        %1138 = vmatprep.subr.bf16.mxu0 0
        %1139 = vmatpush1.bf16.msra.mxu0 0
        %1140 = vmatprep.mubr.bf16.mxu0 0
        %1141 = vmatmul.mubr.bf16.gmra.mrb[0].mxu0 %v1092
        %v1142 = vpop.f32.mrb[0].mxu0
        %v1143 = vadd.f32 %v983, %v1142
        %v1144 = vpop.f32.mrb[0].mxu0
        %v1145 = vpop.f32.mrb[0].mxu0
        %v1146 = vadd.f32 %v988, %v1145
        %v1147 = vpop.f32.mrb[0].mxu0
        %1148 = vmatprep.mubr.bf16.mxu0 0
        %1149 = vmatmul.mubr.bf16.gmra.mrb[0].mxu0 %v1093
        %v1150 = vpop.f32.mrb[0].mxu0
        %v1151 = vadd.f32 %v993, %v1150
        %v1152 = vpop.f32.mrb[0].mxu0
        %v1153 = vpop.f32.mrb[0].mxu0
        %v1154 = vadd.f32 %v998, %v1153
        %v1155 = vpop.f32.mrb[0].mxu0
        %1156 = vmatprep.mubr.bf16.mxu0 0
        %1157 = vmatmul.mubr.bf16.gmra.mrb[0].mxu0 %v1094
        %v1158 = vpop.f32.mrb[0].mxu0
        %v1159 = vadd.f32 %v1003, %v1158
        %v1160 = vpop.f32.mrb[0].mxu0
        %v1161 = vpop.f32.mrb[0].mxu0
        %v1162 = vadd.f32 %v1008, %v1161
        %v1163 = vpop.f32.mrb[0].mxu0
        %1164 = vmatprep.mubr.bf16.mxu0 0
        %1165 = vmatmul.mubr.bf16.gmra.mrb[0].mxu0 %v1095
        %v1166 = vpop.f32.mrb[0].mxu0
        %v1167 = vadd.f32 %v1013, %v1166
        %v1168 = vpop.f32.mrb[0].mxu0
        %v1169 = vpop.f32.mrb[0].mxu0
        %v1170 = vadd.f32 %v1018, %v1169
        %v1171 = vpop.f32.mrb[0].mxu0
        %1172 = vmatprep.mubr.bf16.mxu0 0
        %1173 = vmatmul.mubr.bf16.gmra.mrb[0].mxu0 %v1096
        %v1174 = vpop.f32.mrb[0].mxu0
        %v1175 = vadd.f32 %v1023, %v1174
        %v1176 = vpop.f32.mrb[0].mxu0
        %v1177 = vpop.f32.mrb[0].mxu0
        %v1178 = vadd.f32 %v1028, %v1177
        %v1179 = vpop.f32.mrb[0].mxu0
        %1180 = vmatprep.mubr.bf16.mxu0 0
        %1181 = vmatmul.mubr.bf16.gmra.mrb[0].mxu0 %v1097
        %v1182 = vpop.f32.mrb[0].mxu0
        %v1183 = vadd.f32 %v1033, %v1182
        %v1184 = vpop.f32.mrb[0].mxu0
        %v1185 = vpop.f32.mrb[0].mxu0
        %v1186 = vadd.f32 %v1038, %v1185
        %v1187 = vpop.f32.mrb[0].mxu0
        %1188 = vmatprep.mubr.bf16.mxu0 0
        %1189 = vmatmul.mubr.bf16.gmra.mrb[0].mxu0 %v1098
        %v1190 = vpop.f32.mrb[0].mxu0
        %v1191 = vadd.f32 %v1043, %v1190
        %v1192 = vpop.f32.mrb[0].mxu0
        %v1193 = vpop.f32.mrb[0].mxu0
        %v1194 = vadd.f32 %v1048, %v1193
        %v1195 = vpop.f32.mrb[0].mxu0
        %1196 = vmatprep.mubr.bf16.mxu0 0
        %1197 = vmatmul.mubr.bf16.gmra.mrb[0].mxu0 %v1099
        %v1198 = vpop.f32.mrb[0].mxu0
        %v1199 = vadd.f32 %v1053, %v1198
        %v1200 = vpop.f32.mrb[0].mxu0
        %v1201 = vpop.f32.mrb[0].mxu0
        %v1202 = vadd.f32 %v1058, %v1201
        %v1203 = vpop.f32.mrb[0].mxu0
        %1204 = vdwg.mxu0
        %v1205 = vmax.f32 %v1143, 0.0
        %v1206 = vmax.f32 %v1146, 0.0
        %v1207 = vmax.f32 %v1151, 0.0
        %v1208 = vmax.f32 %v1154, 0.0
        %v1209 = vmax.f32 %v1159, 0.0
        %v1210 = vmax.f32 %v1162, 0.0
        %v1211 = vmax.f32 %v1167, 0.0
        %v1212 = vmax.f32 %v1170, 0.0
        %v1213 = vmax.f32 %v1175, 0.0
        %v1214 = vmax.f32 %v1178, 0.0
        %v1215 = vmax.f32 %v1183, 0.0
        %v1216 = vmax.f32 %v1186, 0.0
        %v1217 = vmax.f32 %v1191, 0.0
        %v1218 = vmax.f32 %v1194, 0.0
        %v1219 = vmax.f32 %v1199, 0.0
        %v1220 = vmax.f32 %v1202, 0.0
        %v1221 = vld [vmem:[%s5] sm:$0xf]
        %v1222 = vld [vmem:[%s5 + $0x4] sm:$0xf]
        %v1223 = vld [vmem:[%s5 + $0x8] sm:$0xf]
        %v1224 = vld [vmem:[%s5 + $0xc] sm:$0xf]
        %v1225 = vld [vmem:[%s5 + $0x10] sm:$0xf]
        %v1226 = vld [vmem:[%s5 + $0x14] sm:$0xf]
        %v1227 = vld [vmem:[%s5 + $0x18] sm:$0xf]
        %v1228 = vld [vmem:[%s5 + $0x1c] sm:$0xf]
        %v1229 = vld [vmem:[%s5 + $0x20] sm:$0xf]
        %v1230 = vld [vmem:[%s5 + $0x24] sm:$0xf]
        %v1231 = vld [vmem:[%s5 + $0x28] sm:$0xf]
        %v1232 = vld [vmem:[%s5 + $0x2c] sm:$0xf]
        %v1233 = vld [vmem:[%s5 + $0x30] sm:$0xf]
        %v1234 = vld [vmem:[%s5 + $0x34] sm:$0xf]
        %v1235 = vld [vmem:[%s5 + $0x38] sm:$0xf]
        %v1236 = vld [vmem:[%s5 + $0x3c] sm:$0xf]
        %v1237 = vld [vmem:[%s5 + $0x40] sm:$0xf]
        %v1238 = vld [vmem:[%s5 + $0x44] sm:$0xf]
        %v1239 = vld [vmem:[%s5 + $0x48] sm:$0xf]
        %v1240 = vld [vmem:[%s5 + $0x4c] sm:$0xf]
        %v1241 = vld [vmem:[%s5 + $0x50] sm:$0xf]
        %v1242 = vld [vmem:[%s5 + $0x54] sm:$0xf]
        %v1243 = vld [vmem:[%s5 + $0x58] sm:$0xf]
        %v1244 = vld [vmem:[%s5 + $0x5c] sm:$0xf]
        %v1245 = vld [vmem:[%s5 + $0x60] sm:$0xf]
        %v1246 = vld [vmem:[%s5 + $0x64] sm:$0xf]
        %v1247 = vld [vmem:[%s5 + $0x68] sm:$0xf]
        %v1248 = vld [vmem:[%s5 + $0x6c] sm:$0xf]
        %v1249 = vld [vmem:[%s5 + $0x70] sm:$0xf]
        %v1250 = vld [vmem:[%s5 + $0x74] sm:$0xf]
        %v1251 = vld [vmem:[%s5 + $0x78] sm:$0xf]
        %v1252 = vld [vmem:[%s5 + $0x7c] sm:$0xf]
        %v1253 = vpack.c.bf16 %v1206, %v1205
        %v1254 = vpack.c.bf16 %v1208, %v1207
        %v1255 = vpack.c.bf16 %v1210, %v1209
        %v1256 = vpack.c.bf16 %v1212, %v1211
        %v1257 = vpack.c.bf16 %v1214, %v1213
        %v1258 = vpack.c.bf16 %v1216, %v1215
        %v1259 = vpack.c.bf16 %v1218, %v1217
        %v1260 = vpack.c.bf16 %v1220, %v1219
        %v1261 = vld [vmem:[%s6] sm:$0xff]
        %v1262 = vld [vmem:[%s6 + $0x8] sm:$0xff]
        %v1263 = vld [vmem:[%s6 + $0x10] sm:$0xff]
        %v1264 = vld [vmem:[%s6 + $0x18] sm:$0xff]
        %v1265 = vld [vmem:[%s6 + $0x20] sm:$0xff]
        %v1266 = vld [vmem:[%s6 + $0x28] sm:$0xff]
        %v1267 = vld [vmem:[%s6 + $0x30] sm:$0xff]
        %v1268 = vld [vmem:[%s6 + $0x38] sm:$0xff]
        %v1269 = vld [vmem:[%s6 + $0x40] sm:$0xff]
        %v1270 = vld [vmem:[%s6 + $0x48] sm:$0xff]
        %v1271 = vld [vmem:[%s6 + $0x50] sm:$0xff]
        %v1272 = vld [vmem:[%s6 + $0x58] sm:$0xff]
        %v1273 = vld [vmem:[%s6 + $0x60] sm:$0xff]
        %v1274 = vld [vmem:[%s6 + $0x68] sm:$0xff]
        %v1275 = vld [vmem:[%s6 + $0x70] sm:$0xff]
        %v1276 = vld [vmem:[%s6 + $0x78] sm:$0xff]
        %v1277 = vld [vmem:[%s6 + $0x80] sm:$0xff]
        %v1278 = vld [vmem:[%s6 + $0x88] sm:$0xff]
        %v1279 = vld [vmem:[%s6 + $0x90] sm:$0xff]
        %v1280 = vld [vmem:[%s6 + $0x98] sm:$0xff]
        %v1281 = vld [vmem:[%s6 + $0xa0] sm:$0xff]
        %v1282 = vld [vmem:[%s6 + $0xa8] sm:$0xff]
        %v1283 = vld [vmem:[%s6 + $0xb0] sm:$0xff]
        %v1284 = vld [vmem:[%s6 + $0xb8] sm:$0xff]
        %v1285 = vld [vmem:[%s6 + $0xc0] sm:$0xff]
        %v1286 = vld [vmem:[%s6 + $0xc8] sm:$0xff]
        %v1287 = vld [vmem:[%s6 + $0xd0] sm:$0xff]
        %v1288 = vld [vmem:[%s6 + $0xd8] sm:$0xff]
        %v1289 = vld [vmem:[%s6 + $0xe0] sm:$0xff]
        %v1290 = vld [vmem:[%s6 + $0xe8] sm:$0xff]
        %v1291 = vld [vmem:[%s6 + $0xf0] sm:$0xff]
        %v1292 = vld [vmem:[%s6 + $0xf8] sm:$0xff]
        %1294 = vset.pattern.permute.xlu0 0
        %1295 = vperm.xlu0 %1294, %v1261
        %v1296 = vpop.permute.xlu0 %1295
        %1299 = vset.pattern.permute.xlu0 0
        %1300 = vperm.xlu0 %1299, %v1262
        %v1301 = vpop.permute.xlu0 %1300
        %1304 = vset.pattern.permute.xlu0 0
        %1305 = vperm.xlu0 %1304, %v1263
        %v1306 = vpop.permute.xlu0 %1305
        %1309 = vset.pattern.permute.xlu0 0
        %1310 = vperm.xlu0 %1309, %v1264
        %v1311 = vpop.permute.xlu0 %1310
        %1314 = vset.pattern.permute.xlu0 0
        %1315 = vperm.xlu0 %1314, %v1265
        %v1316 = vpop.permute.xlu0 %1315
        %1319 = vset.pattern.permute.xlu0 0
        %1320 = vperm.xlu0 %1319, %v1266
        %v1321 = vpop.permute.xlu0 %1320
        %1324 = vset.pattern.permute.xlu0 0
        %1325 = vperm.xlu0 %1324, %v1267
        %v1326 = vpop.permute.xlu0 %1325
        %1329 = vset.pattern.permute.xlu0 0
        %1330 = vperm.xlu0 %1329, %v1268
        %v1331 = vpop.permute.xlu0 %1330
        %1334 = vset.pattern.permute.xlu0 0
        %1335 = vperm.xlu0 %1334, %v1269
        %v1336 = vpop.permute.xlu0 %1335
        %1339 = vset.pattern.permute.xlu0 0
        %1340 = vperm.xlu0 %1339, %v1270
        %v1341 = vpop.permute.xlu0 %1340
        %1344 = vset.pattern.permute.xlu0 0
        %1345 = vperm.xlu0 %1344, %v1271
        %v1346 = vpop.permute.xlu0 %1345
        %1349 = vset.pattern.permute.xlu0 0
        %1350 = vperm.xlu0 %1349, %v1272
        %v1351 = vpop.permute.xlu0 %1350
        %1354 = vset.pattern.permute.xlu0 0
        %1355 = vperm.xlu0 %1354, %v1273
        %v1356 = vpop.permute.xlu0 %1355
        %1359 = vset.pattern.permute.xlu0 0
        %1360 = vperm.xlu0 %1359, %v1274
        %v1361 = vpop.permute.xlu0 %1360
        %1364 = vset.pattern.permute.xlu0 0
        %1365 = vperm.xlu0 %1364, %v1275
        %v1366 = vpop.permute.xlu0 %1365
        %1369 = vset.pattern.permute.xlu0 0
        %1370 = vperm.xlu0 %1369, %v1276
        %v1371 = vpop.permute.xlu0 %1370
        %1374 = vset.pattern.permute.xlu0 0
        %1375 = vperm.xlu0 %1374, %v1277
        %v1376 = vpop.permute.xlu0 %1375
        %1379 = vset.pattern.permute.xlu0 0
        %1380 = vperm.xlu0 %1379, %v1278
        %v1381 = vpop.permute.xlu0 %1380
        %1384 = vset.pattern.permute.xlu0 0
        %1385 = vperm.xlu0 %1384, %v1279
        %v1386 = vpop.permute.xlu0 %1385
        %1389 = vset.pattern.permute.xlu0 0
        %1390 = vperm.xlu0 %1389, %v1280
        %v1391 = vpop.permute.xlu0 %1390
        %1394 = vset.pattern.permute.xlu0 0
        %1395 = vperm.xlu0 %1394, %v1281
        %v1396 = vpop.permute.xlu0 %1395
        %1399 = vset.pattern.permute.xlu0 0
        %1400 = vperm.xlu0 %1399, %v1282
        %v1401 = vpop.permute.xlu0 %1400
        %1404 = vset.pattern.permute.xlu0 0
        %1405 = vperm.xlu0 %1404, %v1283
        %v1406 = vpop.permute.xlu0 %1405
        %1409 = vset.pattern.permute.xlu0 0
        %1410 = vperm.xlu0 %1409, %v1284
        %v1411 = vpop.permute.xlu0 %1410
        %1414 = vset.pattern.permute.xlu0 0
        %1415 = vperm.xlu0 %1414, %v1285
        %v1416 = vpop.permute.xlu0 %1415
        %1419 = vset.pattern.permute.xlu0 0
        %1420 = vperm.xlu0 %1419, %v1286
        %v1421 = vpop.permute.xlu0 %1420
        %1424 = vset.pattern.permute.xlu0 0
        %1425 = vperm.xlu0 %1424, %v1287
        %v1426 = vpop.permute.xlu0 %1425
        %1429 = vset.pattern.permute.xlu0 0
        %1430 = vperm.xlu0 %1429, %v1288
        %v1431 = vpop.permute.xlu0 %1430
        %1434 = vset.pattern.permute.xlu0 0
        %1435 = vperm.xlu0 %1434, %v1289
        %v1436 = vpop.permute.xlu0 %1435
        %1439 = vset.pattern.permute.xlu0 0
        %1440 = vperm.xlu0 %1439, %v1290
        %v1441 = vpop.permute.xlu0 %1440
        %1444 = vset.pattern.permute.xlu0 0
        %1445 = vperm.xlu0 %1444, %v1291
        %v1446 = vpop.permute.xlu0 %1445
        %1449 = vset.pattern.permute.xlu0 0
        %1450 = vperm.xlu0 %1449, %v1292
        %v1451 = vpop.permute.xlu0 %1450
        %v1485 = vunpack.c.l.b16 %v1221
        %v1486 = vunpack.c.l.b16 %v1222
        %v1487 = vunpack.c.l.b16 %v1223
        %v1488 = vunpack.c.l.b16 %v1224
        %v1489 = vunpack.c.l.b16 %v1225
        %v1490 = vunpack.c.l.b16 %v1226
        %v1491 = vunpack.c.l.b16 %v1227
        %v1492 = vunpack.c.l.b16 %v1228
        %v1493 = vunpack.c.l.b16 %v1229
        %v1494 = vunpack.c.l.b16 %v1230
        %v1495 = vunpack.c.l.b16 %v1231
        %v1496 = vunpack.c.l.b16 %v1232
        %v1497 = vunpack.c.l.b16 %v1233
        %v1498 = vunpack.c.l.b16 %v1234
        %v1499 = vunpack.c.l.b16 %v1235
        %v1500 = vunpack.c.l.b16 %v1236
        %v1501 = vunpack.c.l.b16 %v1237
        %v1502 = vunpack.c.l.b16 %v1238
        %v1503 = vunpack.c.l.b16 %v1239
        %v1504 = vunpack.c.l.b16 %v1240
        %v1505 = vunpack.c.l.b16 %v1241
        %v1506 = vunpack.c.l.b16 %v1242
        %v1507 = vunpack.c.l.b16 %v1243
        %v1508 = vunpack.c.l.b16 %v1244
        %v1509 = vunpack.c.l.b16 %v1245
        %v1510 = vunpack.c.l.b16 %v1246
        %v1511 = vunpack.c.l.b16 %v1247
        %v1512 = vunpack.c.l.b16 %v1248
        %v1513 = vunpack.c.l.b16 %v1249
        %v1514 = vunpack.c.l.b16 %v1250
        %v1515 = vunpack.c.l.b16 %v1251
        %v1516 = vunpack.c.l.b16 %v1252
        %v1517 = vpack.c.b16 %v1486, %v1485
        %v1518 = vpack.c.b16 %v1488, %v1487
        %v1519 = vpack.c.b16 %v1490, %v1489
        %v1520 = vpack.c.b16 %v1492, %v1491
        %v1521 = vpack.c.b16 %v1494, %v1493
        %v1522 = vpack.c.b16 %v1496, %v1495
        %v1523 = vpack.c.b16 %v1498, %v1497
        %v1524 = vpack.c.b16 %v1500, %v1499
        %v1525 = vpack.c.b16 %v1502, %v1501
        %v1526 = vpack.c.b16 %v1504, %v1503
        %v1527 = vpack.c.b16 %v1506, %v1505
        %v1528 = vpack.c.b16 %v1508, %v1507
        %v1529 = vpack.c.b16 %v1510, %v1509
        %v1530 = vpack.c.b16 %v1512, %v1511
        %v1531 = vpack.c.b16 %v1514, %v1513
        %v1532 = vpack.c.b16 %v1516, %v1515
        %1549 = vmatprep.subr.bf16.mxu0 0
        %1550 = vmatpush1.bf16.msra.mxu0 %v1253
        %1551 = vmatprep.subr.bf16.mxu0 0
        %1552 = vmatpush1.bf16.msra.mxu0 %v1254
        %1553 = vmatprep.subr.bf16.mxu0 0
        %1554 = vmatpush1.bf16.msra.mxu0 %v1255
        %1555 = vmatprep.subr.bf16.mxu0 0
        %1556 = vmatpush1.bf16.msra.mxu0 %v1256
        %1557 = vmatprep.subr.bf16.mxu0 0
        %1558 = vmatpush1.bf16.msra.mxu0 %v1257
        %1559 = vmatprep.subr.bf16.mxu0 0
        %1560 = vmatpush1.bf16.msra.mxu0 %v1258
        %1561 = vmatprep.subr.bf16.mxu0 0
        %1562 = vmatpush1.bf16.msra.mxu0 %v1259
        %1563 = vmatprep.subr.bf16.mxu0 0
        %1564 = vmatpush1.bf16.msra.mxu0 %v1260
        %1565 = vmatprep.subr.bf16.mxu0 0
        %1566 = vmatpush1.bf16.msra.mxu0 0
        %1567 = vmatprep.subr.bf16.mxu0 0
        %1568 = vmatpush1.bf16.msra.mxu0 0
        %1569 = vmatprep.subr.bf16.mxu0 0
        %1570 = vmatpush1.bf16.msra.mxu0 0
        %1571 = vmatprep.subr.bf16.mxu0 0
        %1572 = vmatpush1.bf16.msra.mxu0 0
        %1573 = vmatprep.subr.bf16.mxu0 0
        %1574 = vmatpush1.bf16.msra.mxu0 0
        %1575 = vmatprep.subr.bf16.mxu0 0
        %1576 = vmatpush1.bf16.msra.mxu0 0
        %1577 = vmatprep.subr.bf16.mxu0 0
        %1578 = vmatpush1.bf16.msra.mxu0 0
        %1579 = vmatprep.subr.bf16.mxu0 0
        %1580 = vmatpush1.bf16.msra.mxu0 0
        %1581 = vmatprep.mubr.bf16.mxu0 0
        %1582 = vmatmul.mubr.bf16.gmra.mrb[0].mxu0 %v1517
        %v1583 = vpop.f32.mrb[0].mxu0
        %v1584 = vadd.f32 %v1296, %v1583
        %v1585 = vpop.f32.mrb[0].mxu0
        %v1586 = vpop.f32.mrb[0].mxu0
        %v1587 = vadd.f32 %v1301, %v1586
        %v1588 = vpop.f32.mrb[0].mxu0
        %1589 = vmatprep.mubr.bf16.mxu0 0
        %1590 = vmatmul.mubr.bf16.gmra.mrb[0].mxu0 %v1518
        %v1591 = vpop.f32.mrb[0].mxu0
        %v1592 = vadd.f32 %v1306, %v1591
        %v1593 = vpop.f32.mrb[0].mxu0
        %v1594 = vpop.f32.mrb[0].mxu0
        %v1595 = vadd.f32 %v1311, %v1594
        %v1596 = vpop.f32.mrb[0].mxu0
        %1597 = vmatprep.mubr.bf16.mxu0 0
        %1598 = vmatmul.mubr.bf16.gmra.mrb[0].mxu0 %v1519
        %v1599 = vpop.f32.mrb[0].mxu0
        %v1600 = vadd.f32 %v1316, %v1599
        %v1601 = vpop.f32.mrb[0].mxu0
        %v1602 = vpop.f32.mrb[0].mxu0
        %v1603 = vadd.f32 %v1321, %v1602
        %v1604 = vpop.f32.mrb[0].mxu0
        %1605 = vmatprep.mubr.bf16.mxu0 0
        %1606 = vmatmul.mubr.bf16.gmra.mrb[0].mxu0 %v1520
        %v1607 = vpop.f32.mrb[0].mxu0
        %v1608 = vadd.f32 %v1326, %v1607
        %v1609 = vpop.f32.mrb[0].mxu0
        %v1610 = vpop.f32.mrb[0].mxu0
        %v1611 = vadd.f32 %v1331, %v1610
        %v1612 = vpop.f32.mrb[0].mxu0
        %1613 = vmatprep.mubr.bf16.mxu0 0
        %1614 = vmatmul.mubr.bf16.gmra.mrb[0].mxu0 %v1521
        %v1615 = vpop.f32.mrb[0].mxu0
        %v1616 = vadd.f32 %v1336, %v1615
        %v1617 = vpop.f32.mrb[0].mxu0
        %v1618 = vpop.f32.mrb[0].mxu0
        %v1619 = vadd.f32 %v1341, %v1618
        %v1620 = vpop.f32.mrb[0].mxu0
        %1621 = vmatprep.mubr.bf16.mxu0 0
        %1622 = vmatmul.mubr.bf16.gmra.mrb[0].mxu0 %v1522
        %v1623 = vpop.f32.mrb[0].mxu0
        %v1624 = vadd.f32 %v1346, %v1623
        %v1625 = vpop.f32.mrb[0].mxu0
        %v1626 = vpop.f32.mrb[0].mxu0
        %v1627 = vadd.f32 %v1351, %v1626
        %v1628 = vpop.f32.mrb[0].mxu0
        %1629 = vmatprep.mubr.bf16.mxu0 0
        %1630 = vmatmul.mubr.bf16.gmra.mrb[0].mxu0 %v1523
        %v1631 = vpop.f32.mrb[0].mxu0
        %v1632 = vadd.f32 %v1356, %v1631
        %v1633 = vpop.f32.mrb[0].mxu0
        %v1634 = vpop.f32.mrb[0].mxu0
        %v1635 = vadd.f32 %v1361, %v1634
        %v1636 = vpop.f32.mrb[0].mxu0
        %1637 = vmatprep.mubr.bf16.mxu0 0
        %1638 = vmatmul.mubr.bf16.gmra.mrb[0].mxu0 %v1524
        %v1639 = vpop.f32.mrb[0].mxu0
        %v1640 = vadd.f32 %v1366, %v1639
        %v1641 = vpop.f32.mrb[0].mxu0
        %v1642 = vpop.f32.mrb[0].mxu0
        %v1643 = vadd.f32 %v1371, %v1642
        %v1644 = vpop.f32.mrb[0].mxu0
        %1645 = vmatprep.mubr.bf16.mxu0 0
        %1646 = vmatmul.mubr.bf16.gmra.mrb[0].mxu0 %v1525
        %v1647 = vpop.f32.mrb[0].mxu0
        %v1648 = vadd.f32 %v1376, %v1647
        %v1649 = vpop.f32.mrb[0].mxu0
        %v1650 = vpop.f32.mrb[0].mxu0
        %v1651 = vadd.f32 %v1381, %v1650
        %v1652 = vpop.f32.mrb[0].mxu0
        %1653 = vmatprep.mubr.bf16.mxu0 0
        %1654 = vmatmul.mubr.bf16.gmra.mrb[0].mxu0 %v1526
        %v1655 = vpop.f32.mrb[0].mxu0
        %v1656 = vadd.f32 %v1386, %v1655
        %v1657 = vpop.f32.mrb[0].mxu0
        %v1658 = vpop.f32.mrb[0].mxu0
        %v1659 = vadd.f32 %v1391, %v1658
        %v1660 = vpop.f32.mrb[0].mxu0
        %1661 = vmatprep.mubr.bf16.mxu0 0
        %1662 = vmatmul.mubr.bf16.gmra.mrb[0].mxu0 %v1527
        %v1663 = vpop.f32.mrb[0].mxu0
        %v1664 = vadd.f32 %v1396, %v1663
        %v1665 = vpop.f32.mrb[0].mxu0
        %v1666 = vpop.f32.mrb[0].mxu0
        %v1667 = vadd.f32 %v1401, %v1666
        %v1668 = vpop.f32.mrb[0].mxu0
        %1669 = vmatprep.mubr.bf16.mxu0 0
        %1670 = vmatmul.mubr.bf16.gmra.mrb[0].mxu0 %v1528
        %v1671 = vpop.f32.mrb[0].mxu0
        %v1672 = vadd.f32 %v1406, %v1671
        %v1673 = vpop.f32.mrb[0].mxu0
        %v1674 = vpop.f32.mrb[0].mxu0
        %v1675 = vadd.f32 %v1411, %v1674
        %v1676 = vpop.f32.mrb[0].mxu0
        %1677 = vmatprep.mubr.bf16.mxu0 0
        %1678 = vmatmul.mubr.bf16.gmra.mrb[0].mxu0 %v1529
        %v1679 = vpop.f32.mrb[0].mxu0
        %v1680 = vadd.f32 %v1416, %v1679
        %v1681 = vpop.f32.mrb[0].mxu0
        %v1682 = vpop.f32.mrb[0].mxu0
        %v1683 = vadd.f32 %v1421, %v1682
        %v1684 = vpop.f32.mrb[0].mxu0
        %1685 = vmatprep.mubr.bf16.mxu0 0
        %1686 = vmatmul.mubr.bf16.gmra.mrb[0].mxu0 %v1530
        %v1687 = vpop.f32.mrb[0].mxu0
        %v1688 = vadd.f32 %v1426, %v1687
        %v1689 = vpop.f32.mrb[0].mxu0
        %v1690 = vpop.f32.mrb[0].mxu0
        %v1691 = vadd.f32 %v1431, %v1690
        %v1692 = vpop.f32.mrb[0].mxu0
        %1693 = vmatprep.mubr.bf16.mxu0 0
        %1694 = vmatmul.mubr.bf16.gmra.mrb[0].mxu0 %v1531
        %v1695 = vpop.f32.mrb[0].mxu0
        %v1696 = vadd.f32 %v1436, %v1695
        %v1697 = vpop.f32.mrb[0].mxu0
        %v1698 = vpop.f32.mrb[0].mxu0
        %v1699 = vadd.f32 %v1441, %v1698
        %v1700 = vpop.f32.mrb[0].mxu0
        %1701 = vmatprep.mubr.bf16.mxu0 0
        %1702 = vmatmul.mubr.bf16.gmra.mrb[0].mxu0 %v1532
        %v1703 = vpop.f32.mrb[0].mxu0
        %v1704 = vadd.f32 %v1446, %v1703
        %v1705 = vpop.f32.mrb[0].mxu0
        %v1706 = vpop.f32.mrb[0].mxu0
        %v1707 = vadd.f32 %v1451, %v1706
        %v1708 = vpop.f32.mrb[0].mxu0
        %1709 = vdwg.mxu0
        %v1710 = vmax.f32 %v1584, 0.0
        %v1711 = vmax.f32 %v1587, 0.0
        %v1712 = vmax.f32 %v1592, 0.0
        %v1713 = vmax.f32 %v1595, 0.0
        %v1714 = vmax.f32 %v1600, 0.0
        %v1715 = vmax.f32 %v1603, 0.0
        %v1716 = vmax.f32 %v1608, 0.0
        %v1717 = vmax.f32 %v1611, 0.0
        %v1718 = vmax.f32 %v1616, 0.0
        %v1719 = vmax.f32 %v1619, 0.0
        %v1720 = vmax.f32 %v1624, 0.0
        %v1721 = vmax.f32 %v1627, 0.0
        %v1722 = vmax.f32 %v1632, 0.0
        %v1723 = vmax.f32 %v1635, 0.0
        %v1724 = vmax.f32 %v1640, 0.0
        %v1725 = vmax.f32 %v1643, 0.0
        %v1726 = vmax.f32 %v1648, 0.0
        %v1727 = vmax.f32 %v1651, 0.0
        %v1728 = vmax.f32 %v1656, 0.0
        %v1729 = vmax.f32 %v1659, 0.0
        %v1730 = vmax.f32 %v1664, 0.0
        %v1731 = vmax.f32 %v1667, 0.0
        %v1732 = vmax.f32 %v1672, 0.0
        %v1733 = vmax.f32 %v1675, 0.0
        %v1734 = vmax.f32 %v1680, 0.0
        %v1735 = vmax.f32 %v1683, 0.0
        %v1736 = vmax.f32 %v1688, 0.0
        %v1737 = vmax.f32 %v1691, 0.0
        %v1738 = vmax.f32 %v1696, 0.0
        %v1739 = vmax.f32 %v1699, 0.0
        %v1740 = vmax.f32 %v1704, 0.0
        %v1741 = vmax.f32 %v1707, 0.0
        %1742 = vmax.xlane.f32.xlu0 %v1710
        %v1743 = vpop.xlane.xlu0 %1742
        %1744 = vmax.xlane.f32.xlu0 %v1711
        %v1745 = vpop.xlane.xlu0 %1744
        %1746 = vmax.xlane.f32.xlu0 %v1712
        %v1747 = vpop.xlane.xlu0 %1746
        %1748 = vmax.xlane.f32.xlu0 %v1713
        %v1749 = vpop.xlane.xlu0 %1748
        %1750 = vmax.xlane.f32.xlu0 %v1714
        %v1751 = vpop.xlane.xlu0 %1750
        %1752 = vmax.xlane.f32.xlu0 %v1715
        %v1753 = vpop.xlane.xlu0 %1752
        %1754 = vmax.xlane.f32.xlu0 %v1716
        %v1755 = vpop.xlane.xlu0 %1754
        %1756 = vmax.xlane.f32.xlu0 %v1717
        %v1757 = vpop.xlane.xlu0 %1756
        %1758 = vmax.xlane.f32.xlu0 %v1718
        %v1759 = vpop.xlane.xlu0 %1758
        %1760 = vmax.xlane.f32.xlu0 %v1719
        %v1761 = vpop.xlane.xlu0 %1760
        %1762 = vmax.xlane.f32.xlu0 %v1720
        %v1763 = vpop.xlane.xlu0 %1762
        %1764 = vmax.xlane.f32.xlu0 %v1721
        %v1765 = vpop.xlane.xlu0 %1764
        %1766 = vmax.xlane.f32.xlu0 %v1722
        %v1767 = vpop.xlane.xlu0 %1766
        %1768 = vmax.xlane.f32.xlu0 %v1723
        %v1769 = vpop.xlane.xlu0 %1768
        %1770 = vmax.xlane.f32.xlu0 %v1724
        %v1771 = vpop.xlane.xlu0 %1770
        %1772 = vmax.xlane.f32.xlu0 %v1725
        %v1773 = vpop.xlane.xlu0 %1772
        %1774 = vmax.xlane.f32.xlu0 %v1726
        %v1775 = vpop.xlane.xlu0 %1774
        %1776 = vmax.xlane.f32.xlu0 %v1727
        %v1777 = vpop.xlane.xlu0 %1776
        %1778 = vmax.xlane.f32.xlu0 %v1728
        %v1779 = vpop.xlane.xlu0 %1778
        %1780 = vmax.xlane.f32.xlu0 %v1729
        %v1781 = vpop.xlane.xlu0 %1780
        %1782 = vmax.xlane.f32.xlu0 %v1730
        %v1783 = vpop.xlane.xlu0 %1782
        %1784 = vmax.xlane.f32.xlu0 %v1731
        %v1785 = vpop.xlane.xlu0 %1784
        %1786 = vmax.xlane.f32.xlu0 %v1732
        %v1787 = vpop.xlane.xlu0 %1786
        %1788 = vmax.xlane.f32.xlu0 %v1733
        %v1789 = vpop.xlane.xlu0 %1788
        %1790 = vmax.xlane.f32.xlu0 %v1734
        %v1791 = vpop.xlane.xlu0 %1790
        %1792 = vmax.xlane.f32.xlu0 %v1735
        %v1793 = vpop.xlane.xlu0 %1792
        %1794 = vmax.xlane.f32.xlu0 %v1736
        %v1795 = vpop.xlane.xlu0 %1794
        %1796 = vmax.xlane.f32.xlu0 %v1737
        %v1797 = vpop.xlane.xlu0 %1796
        %1798 = vmax.xlane.f32.xlu0 %v1738
        %v1799 = vpop.xlane.xlu0 %1798
        %1800 = vmax.xlane.f32.xlu0 %v1739
        %v1801 = vpop.xlane.xlu0 %1800
        %1802 = vmax.xlane.f32.xlu0 %v1740
        %v1803 = vpop.xlane.xlu0 %1802
        %1804 = vmax.xlane.f32.xlu0 %v1741
        %v1805 = vpop.xlane.xlu0 %1804
        %v1806 = vld [vmem:[#allocation2] sm:$0xff]
        %v1807 = vld [vmem:[#allocation2 + $0x8] sm:$0xff]
        %v1808 = vld [vmem:[#allocation2 + $0x10] sm:$0xff]
        %v1809 = vld [vmem:[#allocation2 + $0x18] sm:$0xff]
        %v1810 = vld [vmem:[#allocation2 + $0x20] sm:$0xff]
        %v1811 = vld [vmem:[#allocation2 + $0x28] sm:$0xff]
        %v1812 = vld [vmem:[#allocation2 + $0x30] sm:$0xff]
        %v1813 = vld [vmem:[#allocation2 + $0x38] sm:$0xff]
        %v1814 = vld [vmem:[#allocation2 + $0x40] sm:$0xff]
        %v1815 = vld [vmem:[#allocation2 + $0x48] sm:$0xff]
        %v1816 = vld [vmem:[#allocation2 + $0x50] sm:$0xff]
        %v1817 = vld [vmem:[#allocation2 + $0x58] sm:$0xff]
        %v1818 = vld [vmem:[#allocation2 + $0x60] sm:$0xff]
        %v1819 = vld [vmem:[#allocation2 + $0x68] sm:$0xff]
        %v1820 = vld [vmem:[#allocation2 + $0x70] sm:$0xff]
        %v1821 = vld [vmem:[#allocation2 + $0x78] sm:$0xff]
        %v1822 = vld [vmem:[#allocation2 + $0x80] sm:$0xff]
        %v1823 = vld [vmem:[#allocation2 + $0x88] sm:$0xff]
        %v1824 = vld [vmem:[#allocation2 + $0x90] sm:$0xff]
        %v1825 = vld [vmem:[#allocation2 + $0x98] sm:$0xff]
        %v1826 = vld [vmem:[#allocation2 + $0xa0] sm:$0xff]
        %v1827 = vld [vmem:[#allocation2 + $0xa8] sm:$0xff]
        %v1828 = vld [vmem:[#allocation2 + $0xb0] sm:$0xff]
        %v1829 = vld [vmem:[#allocation2 + $0xb8] sm:$0xff]
        %v1830 = vld [vmem:[#allocation2 + $0xc0] sm:$0xff]
        %v1831 = vld [vmem:[#allocation2 + $0xc8] sm:$0xff]
        %v1832 = vld [vmem:[#allocation2 + $0xd0] sm:$0xff]
        %v1833 = vld [vmem:[#allocation2 + $0xd8] sm:$0xff]
        %v1834 = vld [vmem:[#allocation2 + $0xe0] sm:$0xff]
        %v1835 = vld [vmem:[#allocation2 + $0xe8] sm:$0xff]
        %v1836 = vld [vmem:[#allocation2 + $0xf0] sm:$0xff]
        %v1837 = vld [vmem:[#allocation2 + $0xf8] sm:$0xff]
        %v1838 = vmax.f32 %v1806, %v1743
        %v1839 = vmax.f32 %v1807, %v1745
        %v1840 = vmax.f32 %v1808, %v1747
        %v1841 = vmax.f32 %v1809, %v1749
        %v1842 = vmax.f32 %v1810, %v1751
        %v1843 = vmax.f32 %v1811, %v1753
        %v1844 = vmax.f32 %v1812, %v1755
        %v1845 = vmax.f32 %v1813, %v1757
        %v1846 = vmax.f32 %v1814, %v1759
        %v1847 = vmax.f32 %v1815, %v1761
        %v1848 = vmax.f32 %v1816, %v1763
        %v1849 = vmax.f32 %v1817, %v1765
        %v1850 = vmax.f32 %v1818, %v1767
        %v1851 = vmax.f32 %v1819, %v1769
        %v1852 = vmax.f32 %v1820, %v1771
        %v1853 = vmax.f32 %v1821, %v1773
        %v1854 = vmax.f32 %v1822, %v1775
        %v1855 = vmax.f32 %v1823, %v1777
        %v1856 = vmax.f32 %v1824, %v1779
        %v1857 = vmax.f32 %v1825, %v1781
        %v1858 = vmax.f32 %v1826, %v1783
        %v1859 = vmax.f32 %v1827, %v1785
        %v1860 = vmax.f32 %v1828, %v1787
        %v1861 = vmax.f32 %v1829, %v1789
        %v1862 = vmax.f32 %v1830, %v1791
        %v1863 = vmax.f32 %v1831, %v1793
        %v1864 = vmax.f32 %v1832, %v1795
        %v1865 = vmax.f32 %v1833, %v1797
        %v1866 = vmax.f32 %v1834, %v1799
        %v1867 = vmax.f32 %v1835, %v1801
        %v1868 = vmax.f32 %v1836, %v1803
        %v1869 = vmax.f32 %v1837, %v1805
        %vm1870 = vcmask 7168
        %1871 = vst.msk [vmem:[#allocation2] sm:$0xff] %vm1870, %v1838
        %1872 = vst.msk [vmem:[#allocation2 + $0x8] sm:$0xff] %vm1870, %v1839
        %1873 = vst.msk [vmem:[#allocation2 + $0x10] sm:$0xff] %vm1870, %v1840
        %1874 = vst.msk [vmem:[#allocation2 + $0x18] sm:$0xff] %vm1870, %v1841
        %1875 = vst.msk [vmem:[#allocation2 + $0x20] sm:$0xff] %vm1870, %v1842
        %1876 = vst.msk [vmem:[#allocation2 + $0x28] sm:$0xff] %vm1870, %v1843
        %1877 = vst.msk [vmem:[#allocation2 + $0x30] sm:$0xff] %vm1870, %v1844
        %1878 = vst.msk [vmem:[#allocation2 + $0x38] sm:$0xff] %vm1870, %v1845
        %1879 = vst.msk [vmem:[#allocation2 + $0x40] sm:$0xff] %vm1870, %v1846
        %1880 = vst.msk [vmem:[#allocation2 + $0x48] sm:$0xff] %vm1870, %v1847
        %1881 = vst.msk [vmem:[#allocation2 + $0x50] sm:$0xff] %vm1870, %v1848
        %1882 = vst.msk [vmem:[#allocation2 + $0x58] sm:$0xff] %vm1870, %v1849
        %1883 = vst.msk [vmem:[#allocation2 + $0x60] sm:$0xff] %vm1870, %v1850
        %1884 = vst.msk [vmem:[#allocation2 + $0x68] sm:$0xff] %vm1870, %v1851
        %1885 = vst.msk [vmem:[#allocation2 + $0x70] sm:$0xff] %vm1870, %v1852
        %1886 = vst.msk [vmem:[#allocation2 + $0x78] sm:$0xff] %vm1870, %v1853
        %1887 = vst.msk [vmem:[#allocation2 + $0x80] sm:$0xff] %vm1870, %v1854
        %1888 = vst.msk [vmem:[#allocation2 + $0x88] sm:$0xff] %vm1870, %v1855
        %1889 = vst.msk [vmem:[#allocation2 + $0x90] sm:$0xff] %vm1870, %v1856
        %1890 = vst.msk [vmem:[#allocation2 + $0x98] sm:$0xff] %vm1870, %v1857
        %1891 = vst.msk [vmem:[#allocation2 + $0xa0] sm:$0xff] %vm1870, %v1858
        %1892 = vst.msk [vmem:[#allocation2 + $0xa8] sm:$0xff] %vm1870, %v1859
        %1893 = vst.msk [vmem:[#allocation2 + $0xb0] sm:$0xff] %vm1870, %v1860
        %1894 = vst.msk [vmem:[#allocation2 + $0xb8] sm:$0xff] %vm1870, %v1861
        %1895 = vst.msk [vmem:[#allocation2 + $0xc0] sm:$0xff] %vm1870, %v1862
        %1896 = vst.msk [vmem:[#allocation2 + $0xc8] sm:$0xff] %vm1870, %v1863
        %1897 = vst.msk [vmem:[#allocation2 + $0xd0] sm:$0xff] %vm1870, %v1864
        %1898 = vst.msk [vmem:[#allocation2 + $0xd8] sm:$0xff] %vm1870, %v1865
        %1899 = vst.msk [vmem:[#allocation2 + $0xe0] sm:$0xff] %vm1870, %v1866
        %1900 = vst.msk [vmem:[#allocation2 + $0xe8] sm:$0xff] %vm1870, %v1867
        %1901 = vst.msk [vmem:[#allocation2 + $0xf0] sm:$0xff] %vm1870, %v1868
        %1902 = vst.msk [vmem:[#allocation2 + $0xf8] sm:$0xff] %vm1870, %v1869
        // Predicated region
        $region77: #{tpu_custom_call.1} parent=71 // pred_check
          %p1903 = pneg %p459
        $region78: #{tpu_custom_call.1} parent=71 // pred_check_branch
          %1905 = sbr.rel (%p1903) target = $region80
        $region79: #{tpu_custom_call.1} parent=71 // pred_region
          %v1906 = vld [vmem:[#allocation2] sm:$0xff]
          %v1907 = vld [vmem:[#allocation2 + $0x8] sm:$0xff]
          %v1908 = vld [vmem:[#allocation2 + $0x10] sm:$0xff]
          %v1909 = vld [vmem:[#allocation2 + $0x18] sm:$0xff]
          %v1910 = vld [vmem:[#allocation2 + $0x20] sm:$0xff]
          %v1911 = vld [vmem:[#allocation2 + $0x28] sm:$0xff]
          %v1912 = vld [vmem:[#allocation2 + $0x30] sm:$0xff]
          %v1913 = vld [vmem:[#allocation2 + $0x38] sm:$0xff]
          %v1914 = vld [vmem:[#allocation2 + $0x40] sm:$0xff]
          %v1915 = vld [vmem:[#allocation2 + $0x48] sm:$0xff]
          %v1916 = vld [vmem:[#allocation2 + $0x50] sm:$0xff]
          %v1917 = vld [vmem:[#allocation2 + $0x58] sm:$0xff]
          %v1918 = vld [vmem:[#allocation2 + $0x60] sm:$0xff]
          %v1919 = vld [vmem:[#allocation2 + $0x68] sm:$0xff]
          %v1920 = vld [vmem:[#allocation2 + $0x70] sm:$0xff]
          %v1921 = vld [vmem:[#allocation2 + $0x78] sm:$0xff]
          %v1922 = vld [vmem:[#allocation2 + $0x80] sm:$0xff]
          %v1923 = vld [vmem:[#allocation2 + $0x88] sm:$0xff]
          %v1924 = vld [vmem:[#allocation2 + $0x90] sm:$0xff]
          %v1925 = vld [vmem:[#allocation2 + $0x98] sm:$0xff]
          %v1926 = vld [vmem:[#allocation2 + $0xa0] sm:$0xff]
          %v1927 = vld [vmem:[#allocation2 + $0xa8] sm:$0xff]
          %v1928 = vld [vmem:[#allocation2 + $0xb0] sm:$0xff]
          %v1929 = vld [vmem:[#allocation2 + $0xb8] sm:$0xff]
          %v1930 = vld [vmem:[#allocation2 + $0xc0] sm:$0xff]
          %v1931 = vld [vmem:[#allocation2 + $0xc8] sm:$0xff]
          %v1932 = vld [vmem:[#allocation2 + $0xd0] sm:$0xff]
          %v1933 = vld [vmem:[#allocation2 + $0xd8] sm:$0xff]
          %v1934 = vld [vmem:[#allocation2 + $0xe0] sm:$0xff]
          %v1935 = vld [vmem:[#allocation2 + $0xe8] sm:$0xff]
          %v1936 = vld [vmem:[#allocation2 + $0xf0] sm:$0xff]
          %v1937 = vld [vmem:[#allocation2 + $0xf8] sm:$0xff]
          %1938 = vxpose.xlu0.b32.start [1/16] %v1906, 128
          %1939 = vxpose.xlu0.b32.cont [2/16] %v1907, 128
          %1940 = vxpose.xlu0.b32.cont [3/16] %v1908, 128
          %1941 = vxpose.xlu0.b32.cont [4/16] %v1909, 128
          %1942 = vxpose.xlu0.b32.cont [5/16] %v1910, 128
          %1943 = vxpose.xlu0.b32.cont [6/16] %v1911, 128
          %1944 = vxpose.xlu0.b32.cont [7/16] %v1912, 128
          %1945 = vxpose.xlu0.b32.cont [8/16] %v1913, 128
          %1946 = vxpose.xlu0.b32.cont [9/16] %v1914, 128
          %1947 = vxpose.xlu0.b32.cont [10/16] %v1915, 128
          %1948 = vxpose.xlu0.b32.cont [11/16] %v1916, 128
          %1949 = vxpose.xlu0.b32.cont [12/16] %v1917, 128
          %1950 = vxpose.xlu0.b32.cont [13/16] %v1918, 128
          %1951 = vxpose.xlu0.b32.cont [14/16] %v1919, 128
          %1952 = vxpose.xlu0.b32.cont [15/16] %v1920, 128
          %1953 = vxpose.xlu0.b32.end [16/16] %v1921, 128
          %v1954 = vpop.trf.xlu0
          %v1955 = vpop.trf.xlu0
          %v1956 = vpop.trf.xlu0
          %v1957 = vpop.trf.xlu0
          %v1958 = vpop.trf.xlu0
          %v1959 = vpop.trf.xlu0
          %v1960 = vpop.trf.xlu0
          %v1961 = vpop.trf.xlu0
          %v1962 = vpop.trf.xlu0
          %v1963 = vpop.trf.xlu0
          %v1964 = vpop.trf.xlu0
          %v1965 = vpop.trf.xlu0
          %v1966 = vpop.trf.xlu0
          %v1967 = vpop.trf.xlu0
          %v1968 = vpop.trf.xlu0
          %v1969 = vpop.trf.xlu0
          %1970 = vxpose.xlu0.b32.start [1/16] %v1922, 128
          %1971 = vxpose.xlu0.b32.cont [2/16] %v1923, 128
          %1972 = vxpose.xlu0.b32.cont [3/16] %v1924, 128
          %1973 = vxpose.xlu0.b32.cont [4/16] %v1925, 128
          %1974 = vxpose.xlu0.b32.cont [5/16] %v1926, 128
          %1975 = vxpose.xlu0.b32.cont [6/16] %v1927, 128
          %1976 = vxpose.xlu0.b32.cont [7/16] %v1928, 128
          %1977 = vxpose.xlu0.b32.cont [8/16] %v1929, 128
          %1978 = vxpose.xlu0.b32.cont [9/16] %v1930, 128
          %1979 = vxpose.xlu0.b32.cont [10/16] %v1931, 128
          %1980 = vxpose.xlu0.b32.cont [11/16] %v1932, 128
          %1981 = vxpose.xlu0.b32.cont [12/16] %v1933, 128
          %1982 = vxpose.xlu0.b32.cont [13/16] %v1934, 128
          %1983 = vxpose.xlu0.b32.cont [14/16] %v1935, 128
          %1984 = vxpose.xlu0.b32.cont [15/16] %v1936, 128
          %1985 = vxpose.xlu0.b32.end [16/16] %v1937, 128
          %v1986 = vpop.trf.xlu0
          %v1987 = vpop.trf.xlu0
          %v1988 = vpop.trf.xlu0
          %v1989 = vpop.trf.xlu0
          %v1990 = vpop.trf.xlu0
          %v1991 = vpop.trf.xlu0
          %v1992 = vpop.trf.xlu0
          %v1993 = vpop.trf.xlu0
          %v1994 = vpop.trf.xlu0
          %v1995 = vpop.trf.xlu0
          %v1996 = vpop.trf.xlu0
          %v1997 = vpop.trf.xlu0
          %v1998 = vpop.trf.xlu0
          %v1999 = vpop.trf.xlu0
          %v2000 = vpop.trf.xlu0
          %v2001 = vpop.trf.xlu0
          %v2002 = vpack.c.bf16 %v1954, %v1954
          %v2003 = vpack.c.bf16 %v1986, %v1986
          %v2004 = vld [vmem:[%s7] sm:$0xff]
          %v2005 = vld [vmem:[%s7 + $0x8] sm:$0xff]
          %v2006 = vld [vmem:[%s7 + $0x10] sm:$0xff]
          %v2007 = vld [vmem:[%s7 + $0x18] sm:$0xff]
          %v2008 = vld [vmem:[%s7 + $0x20] sm:$0xff]
          %v2009 = vld [vmem:[%s7 + $0x28] sm:$0xff]
          %v2010 = vld [vmem:[%s7 + $0x30] sm:$0xff]
          %v2011 = vld [vmem:[%s7 + $0x38] sm:$0xff]
          %v2012 = vld [vmem:[%s7 + $0x40] sm:$0xff]
          %v2013 = vld [vmem:[%s7 + $0x48] sm:$0xff]
          %v2014 = vld [vmem:[%s7 + $0x50] sm:$0xff]
          %v2015 = vld [vmem:[%s7 + $0x58] sm:$0xff]
          %v2016 = vld [vmem:[%s7 + $0x60] sm:$0xff]
          %v2017 = vld [vmem:[%s7 + $0x68] sm:$0xff]
          %v2018 = vld [vmem:[%s7 + $0x70] sm:$0xff]
          %v2019 = vld [vmem:[%s7 + $0x78] sm:$0xff]
          %v2020 = vld [vmem:[%s7 + $0x80] sm:$0xff]
          %v2021 = vld [vmem:[%s7 + $0x88] sm:$0xff]
          %v2022 = vld [vmem:[%s7 + $0x90] sm:$0xff]
          %v2023 = vld [vmem:[%s7 + $0x98] sm:$0xff]
          %v2024 = vld [vmem:[%s7 + $0xa0] sm:$0xff]
          %v2025 = vld [vmem:[%s7 + $0xa8] sm:$0xff]
          %v2026 = vld [vmem:[%s7 + $0xb0] sm:$0xff]
          %v2027 = vld [vmem:[%s7 + $0xb8] sm:$0xff]
          %v2028 = vld [vmem:[%s7 + $0xc0] sm:$0xff]
          %v2029 = vld [vmem:[%s7 + $0xc8] sm:$0xff]
          %v2030 = vld [vmem:[%s7 + $0xd0] sm:$0xff]
          %v2031 = vld [vmem:[%s7 + $0xd8] sm:$0xff]
          %v2032 = vld [vmem:[%s7 + $0xe0] sm:$0xff]
          %v2033 = vld [vmem:[%s7 + $0xe8] sm:$0xff]
          %v2034 = vld [vmem:[%s7 + $0xf0] sm:$0xff]
          %v2035 = vld [vmem:[%s7 + $0xf8] sm:$0xff]
          %v2036 = vld [vmem:[%s8] sm:$0x3]
          %v2069 = vunpack.c.l.b16 %v2004
          %v2070 = vunpack.c.h.b16 %v2004
          %v2071 = vunpack.c.l.b16 %v2005
          %v2072 = vunpack.c.h.b16 %v2005
          %v2073 = vunpack.c.l.b16 %v2006
          %v2074 = vunpack.c.h.b16 %v2006
          %v2075 = vunpack.c.l.b16 %v2007
          %v2076 = vunpack.c.h.b16 %v2007
          %v2077 = vunpack.c.l.b16 %v2008
          %v2078 = vunpack.c.h.b16 %v2008
          %v2079 = vunpack.c.l.b16 %v2009
          %v2080 = vunpack.c.h.b16 %v2009
          %v2081 = vunpack.c.l.b16 %v2010
          %v2082 = vunpack.c.h.b16 %v2010
          %v2083 = vunpack.c.l.b16 %v2011
          %v2084 = vunpack.c.h.b16 %v2011
          %v2085 = vunpack.c.l.b16 %v2012
          %v2086 = vunpack.c.h.b16 %v2012
          %v2087 = vunpack.c.l.b16 %v2013
          %v2088 = vunpack.c.h.b16 %v2013
          %v2089 = vunpack.c.l.b16 %v2014
          %v2090 = vunpack.c.h.b16 %v2014
          %v2091 = vunpack.c.l.b16 %v2015
          %v2092 = vunpack.c.h.b16 %v2015
          %v2093 = vunpack.c.l.b16 %v2016
          %v2094 = vunpack.c.h.b16 %v2016
          %v2095 = vunpack.c.l.b16 %v2017
          %v2096 = vunpack.c.h.b16 %v2017
          %v2097 = vunpack.c.l.b16 %v2018
          %v2098 = vunpack.c.h.b16 %v2018
          %v2099 = vunpack.c.l.b16 %v2019
          %v2100 = vunpack.c.h.b16 %v2019
          %v2101 = vunpack.c.l.b16 %v2020
          %v2102 = vunpack.c.h.b16 %v2020
          %v2103 = vunpack.c.l.b16 %v2021
          %v2104 = vunpack.c.h.b16 %v2021
          %v2105 = vunpack.c.l.b16 %v2022
          %v2106 = vunpack.c.h.b16 %v2022
          %v2107 = vunpack.c.l.b16 %v2023
          %v2108 = vunpack.c.h.b16 %v2023
          %v2109 = vunpack.c.l.b16 %v2024
          %v2110 = vunpack.c.h.b16 %v2024
          %v2111 = vunpack.c.l.b16 %v2025
          %v2112 = vunpack.c.h.b16 %v2025
          %v2113 = vunpack.c.l.b16 %v2026
          %v2114 = vunpack.c.h.b16 %v2026
          %v2115 = vunpack.c.l.b16 %v2027
          %v2116 = vunpack.c.h.b16 %v2027
          %v2117 = vunpack.c.l.b16 %v2028
          %v2118 = vunpack.c.h.b16 %v2028
          %v2119 = vunpack.c.l.b16 %v2029
          %v2120 = vunpack.c.h.b16 %v2029
          %v2121 = vunpack.c.l.b16 %v2030
          %v2122 = vunpack.c.h.b16 %v2030
          %v2123 = vunpack.c.l.b16 %v2031
          %v2124 = vunpack.c.h.b16 %v2031
          %v2125 = vunpack.c.l.b16 %v2032
          %v2126 = vunpack.c.h.b16 %v2032
          %v2127 = vunpack.c.l.b16 %v2033
          %v2128 = vunpack.c.h.b16 %v2033
          %v2129 = vunpack.c.l.b16 %v2034
          %v2130 = vunpack.c.h.b16 %v2034
          %v2131 = vunpack.c.l.b16 %v2035
          %v2132 = vunpack.c.h.b16 %v2035
          %v2133 = vpack.c.b16 %v2071, %v2069
          %v2134 = vpack.c.b16 %v2072, %v2070
          %v2135 = vpack.c.b16 %v2075, %v2073
          %v2136 = vpack.c.b16 %v2076, %v2074
          %v2137 = vpack.c.b16 %v2079, %v2077
          %v2138 = vpack.c.b16 %v2080, %v2078
          %v2139 = vpack.c.b16 %v2083, %v2081
          %v2140 = vpack.c.b16 %v2084, %v2082
          %v2141 = vpack.c.b16 %v2087, %v2085
          %v2142 = vpack.c.b16 %v2088, %v2086
          %v2143 = vpack.c.b16 %v2091, %v2089
          %v2144 = vpack.c.b16 %v2092, %v2090
          %v2145 = vpack.c.b16 %v2095, %v2093
          %v2146 = vpack.c.b16 %v2096, %v2094
          %v2147 = vpack.c.b16 %v2099, %v2097
          %v2148 = vpack.c.b16 %v2100, %v2098
          %v2149 = vpack.c.b16 %v2103, %v2101
          %v2150 = vpack.c.b16 %v2104, %v2102
          %v2151 = vpack.c.b16 %v2107, %v2105
          %v2152 = vpack.c.b16 %v2108, %v2106
          %v2153 = vpack.c.b16 %v2111, %v2109
          %v2154 = vpack.c.b16 %v2112, %v2110
          %v2155 = vpack.c.b16 %v2115, %v2113
          %v2156 = vpack.c.b16 %v2116, %v2114
          %v2157 = vpack.c.b16 %v2119, %v2117
          %v2158 = vpack.c.b16 %v2120, %v2118
          %v2159 = vpack.c.b16 %v2123, %v2121
          %v2160 = vpack.c.b16 %v2124, %v2122
          %v2161 = vpack.c.b16 %v2127, %v2125
          %v2162 = vpack.c.b16 %v2128, %v2126
          %v2163 = vpack.c.b16 %v2131, %v2129
          %v2164 = vpack.c.b16 %v2132, %v2130
          %v2198 = vlaneseq
          %v2199 = vshrl.u32 %v2198, 7
          %v2200 = vsub.s32 0, %v2199
          %v2201 = vrot.slane %v2036, %v2200
          %v2202 = vlaneseq
          %v2203 = vshrl.u32 %v2202, 7
          %v2204 = vsub.s32 1, %v2203
          %v2205 = vrot.slane %v2036, %v2204
          %2208 = vmatprep.subr.bf16.mxu0 %v2134
          %2209 = vmatpush1.bf16.msra.mxu0 %v2133
          %2210 = vmatprep.subr.bf16.mxu0 %v2136
          %2211 = vmatpush1.bf16.msra.mxu0 %v2135
          %2212 = vmatprep.subr.bf16.mxu0 %v2138
          %2213 = vmatpush1.bf16.msra.mxu0 %v2137
          %2214 = vmatprep.subr.bf16.mxu0 %v2140
          %2215 = vmatpush1.bf16.msra.mxu0 %v2139
          %2216 = vmatprep.subr.bf16.mxu0 %v2142
          %2217 = vmatpush1.bf16.msra.mxu0 %v2141
          %2218 = vmatprep.subr.bf16.mxu0 %v2144
          %2219 = vmatpush1.bf16.msra.mxu0 %v2143
          %2220 = vmatprep.subr.bf16.mxu0 %v2146
          %2221 = vmatpush1.bf16.msra.mxu0 %v2145
          %2222 = vmatprep.subr.bf16.mxu0 %v2148
          %2223 = vmatpush1.bf16.msra.mxu0 %v2147
          %2224 = vmatprep.subr.bf16.mxu0 %v2150
          %2225 = vmatpush1.bf16.msra.mxu0 %v2149
          %2226 = vmatprep.subr.bf16.mxu0 %v2152
          %2227 = vmatpush1.bf16.msra.mxu0 %v2151
          %2228 = vmatprep.subr.bf16.mxu0 %v2154
          %2229 = vmatpush1.bf16.msra.mxu0 %v2153
          %2230 = vmatprep.subr.bf16.mxu0 %v2156
          %2231 = vmatpush1.bf16.msra.mxu0 %v2155
          %2232 = vmatprep.subr.bf16.mxu0 %v2158
          %2233 = vmatpush1.bf16.msra.mxu0 %v2157
          %2234 = vmatprep.subr.bf16.mxu0 %v2160
          %2235 = vmatpush1.bf16.msra.mxu0 %v2159
          %2236 = vmatprep.subr.bf16.mxu0 %v2162
          %2237 = vmatpush1.bf16.msra.mxu0 %v2161
          %2238 = vmatprep.subr.bf16.mxu0 %v2164
          %2239 = vmatpush1.bf16.msra.mxu0 %v2163
          %2240 = vmatprep.mubr.bf16.mxu0 %v2003
          %2241 = vmatmul.mubr.bf16.gmra.mrb[0].mxu0 %v2002
          %v2242 = vpop.f32.mrb[0].mxu0
          %v2243 = vadd.f32 %v2201, %v2242
          %v2244 = vpop.f32.mrb[0].mxu0
          %v2245 = vadd.f32 %v2205, %v2244
          %v2246 = vpop.f32.mrb[0].mxu0
          %v2247 = vpop.f32.mrb[0].mxu0
          %2248 = vdwg.mxu0
          %v2249 = vmax.f32 %v2243, 0.0
          %v2250 = vmax.f32 %v2245, 0.0
          %v2251 = vpack.c.bf16 %v2249, %v2249
          %v2252 = vpack.c.bf16 %v2250, %v2250
          %v2253 = vld [vmem:[%s9] sm:$0xf]
          %v2254 = vld [vmem:[%s9 + $0x4] sm:$0xf]
          %v2255 = vld [vmem:[%s9 + $0x8] sm:$0xf]
          %v2256 = vld [vmem:[%s9 + $0xc] sm:$0xf]
          %v2257 = vld [vmem:[%s9 + $0x10] sm:$0xf]
          %v2258 = vld [vmem:[%s9 + $0x14] sm:$0xf]
          %v2259 = vld [vmem:[%s9 + $0x18] sm:$0xf]
          %v2260 = vld [vmem:[%s9 + $0x1c] sm:$0xf]
          %v2261 = vld [vmem:[%s9 + $0x20] sm:$0xf]
          %v2262 = vld [vmem:[%s9 + $0x24] sm:$0xf]
          %v2263 = vld [vmem:[%s9 + $0x28] sm:$0xf]
          %v2264 = vld [vmem:[%s9 + $0x2c] sm:$0xf]
          %v2265 = vld [vmem:[%s9 + $0x30] sm:$0xf]
          %v2266 = vld [vmem:[%s9 + $0x34] sm:$0xf]
          %v2267 = vld [vmem:[%s9 + $0x38] sm:$0xf]
          %v2268 = vld [vmem:[%s9 + $0x3c] sm:$0xf]
          %v2269 = vld [vmem:[%s9 + $0x40] sm:$0xf]
          %v2270 = vld [vmem:[%s9 + $0x44] sm:$0xf]
          %v2271 = vld [vmem:[%s9 + $0x48] sm:$0xf]
          %v2272 = vld [vmem:[%s9 + $0x4c] sm:$0xf]
          %v2273 = vld [vmem:[%s9 + $0x50] sm:$0xf]
          %v2274 = vld [vmem:[%s9 + $0x54] sm:$0xf]
          %v2275 = vld [vmem:[%s9 + $0x58] sm:$0xf]
          %v2276 = vld [vmem:[%s9 + $0x5c] sm:$0xf]
          %v2277 = vld [vmem:[%s9 + $0x60] sm:$0xf]
          %v2278 = vld [vmem:[%s9 + $0x64] sm:$0xf]
          %v2279 = vld [vmem:[%s9 + $0x68] sm:$0xf]
          %v2280 = vld [vmem:[%s9 + $0x6c] sm:$0xf]
          %v2281 = vld [vmem:[%s9 + $0x70] sm:$0xf]
          %v2282 = vld [vmem:[%s9 + $0x74] sm:$0xf]
          %v2283 = vld [vmem:[%s9 + $0x78] sm:$0xf]
          %v2284 = vld [vmem:[%s9 + $0x7c] sm:$0xf]
          %v2285 = vld [vmem:[%s10] sm:$0x1]
          %v2318 = vunpack.c.l.b16 %v2253
          %v2319 = vunpack.c.l.b16 %v2254
          %v2320 = vunpack.c.l.b16 %v2255
          %v2321 = vunpack.c.l.b16 %v2256
          %v2322 = vunpack.c.l.b16 %v2257
          %v2323 = vunpack.c.l.b16 %v2258
          %v2324 = vunpack.c.l.b16 %v2259
          %v2325 = vunpack.c.l.b16 %v2260
          %v2326 = vunpack.c.l.b16 %v2261
          %v2327 = vunpack.c.l.b16 %v2262
          %v2328 = vunpack.c.l.b16 %v2263
          %v2329 = vunpack.c.l.b16 %v2264
          %v2330 = vunpack.c.l.b16 %v2265
          %v2331 = vunpack.c.l.b16 %v2266
          %v2332 = vunpack.c.l.b16 %v2267
          %v2333 = vunpack.c.l.b16 %v2268
          %v2334 = vunpack.c.l.b16 %v2269
          %v2335 = vunpack.c.l.b16 %v2270
          %v2336 = vunpack.c.l.b16 %v2271
          %v2337 = vunpack.c.l.b16 %v2272
          %v2338 = vunpack.c.l.b16 %v2273
          %v2339 = vunpack.c.l.b16 %v2274
          %v2340 = vunpack.c.l.b16 %v2275
          %v2341 = vunpack.c.l.b16 %v2276
          %v2342 = vunpack.c.l.b16 %v2277
          %v2343 = vunpack.c.l.b16 %v2278
          %v2344 = vunpack.c.l.b16 %v2279
          %v2345 = vunpack.c.l.b16 %v2280
          %v2346 = vunpack.c.l.b16 %v2281
          %v2347 = vunpack.c.l.b16 %v2282
          %v2348 = vunpack.c.l.b16 %v2283
          %v2349 = vunpack.c.l.b16 %v2284
          %v2350 = vpack.c.b16 %v2319, %v2318
          %v2351 = vpack.c.b16 %v2321, %v2320
          %v2352 = vpack.c.b16 %v2323, %v2322
          %v2353 = vpack.c.b16 %v2325, %v2324
          %v2354 = vpack.c.b16 %v2327, %v2326
          %v2355 = vpack.c.b16 %v2329, %v2328
          %v2356 = vpack.c.b16 %v2331, %v2330
          %v2357 = vpack.c.b16 %v2333, %v2332
          %v2358 = vpack.c.b16 %v2335, %v2334
          %v2359 = vpack.c.b16 %v2337, %v2336
          %v2360 = vpack.c.b16 %v2339, %v2338
          %v2361 = vpack.c.b16 %v2341, %v2340
          %v2362 = vpack.c.b16 %v2343, %v2342
          %v2363 = vpack.c.b16 %v2345, %v2344
          %v2364 = vpack.c.b16 %v2347, %v2346
          %v2365 = vpack.c.b16 %v2349, %v2348
          %2382 = vmatprep.subr.bf16.mxu0 0
          %2383 = vmatpush1.bf16.msra.mxu0 %v2350
          %2384 = vmatprep.subr.bf16.mxu0 0
          %2385 = vmatpush1.bf16.msra.mxu0 %v2351
          %2386 = vmatprep.subr.bf16.mxu0 0
          %2387 = vmatpush1.bf16.msra.mxu0 %v2352
          %2388 = vmatprep.subr.bf16.mxu0 0
          %2389 = vmatpush1.bf16.msra.mxu0 %v2353
          %2390 = vmatprep.subr.bf16.mxu0 0
          %2391 = vmatpush1.bf16.msra.mxu0 %v2354
          %2392 = vmatprep.subr.bf16.mxu0 0
          %2393 = vmatpush1.bf16.msra.mxu0 %v2355
          %2394 = vmatprep.subr.bf16.mxu0 0
          %2395 = vmatpush1.bf16.msra.mxu0 %v2356
          %2396 = vmatprep.subr.bf16.mxu0 0
          %2397 = vmatpush1.bf16.msra.mxu0 %v2357
          %2398 = vmatprep.subr.bf16.mxu0 0
          %2399 = vmatpush1.bf16.msra.mxu0 %v2358
          %2400 = vmatprep.subr.bf16.mxu0 0
          %2401 = vmatpush1.bf16.msra.mxu0 %v2359
          %2402 = vmatprep.subr.bf16.mxu0 0
          %2403 = vmatpush1.bf16.msra.mxu0 %v2360
          %2404 = vmatprep.subr.bf16.mxu0 0
          %2405 = vmatpush1.bf16.msra.mxu0 %v2361
          %2406 = vmatprep.subr.bf16.mxu0 0
          %2407 = vmatpush1.bf16.msra.mxu0 %v2362
          %2408 = vmatprep.subr.bf16.mxu0 0
          %2409 = vmatpush1.bf16.msra.mxu0 %v2363
          %2410 = vmatprep.subr.bf16.mxu0 0
          %2411 = vmatpush1.bf16.msra.mxu0 %v2364
          %2412 = vmatprep.subr.bf16.mxu0 0
          %2413 = vmatpush1.bf16.msra.mxu0 %v2365
          %2414 = vmatprep.mubr.bf16.mxu0 %v2252
          %2415 = vmatmul.mubr.bf16.gmra.mrb[0].mxu0 %v2251
          %v2416 = vpop.f32.mrb[0].mxu0
          %v2417 = vadd.f32 %v2285, %v2416
          %v2418 = vpop.f32.mrb[0].mxu0
          %v2419 = vpop.f32.mrb[0].mxu0
          %v2420 = vpop.f32.mrb[0].mxu0
          %2421 = vdwg.mxu0
          %v2422 = vmax.f32 %v2417, 0.0
          %v2423 = vpack.c.bf16 %v2422, %v2422
          %v2424 = vld [vmem:[%s11] sm:$0xf]
          %v2425 = vld [vmem:[%s11 + $0x4] sm:$0xf]
          %v2426 = vld [vmem:[%s11 + $0x8] sm:$0xf]
          %v2427 = vld [vmem:[%s11 + $0xc] sm:$0xf]
          %v2428 = vld [vmem:[%s11 + $0x10] sm:$0xf]
          %v2429 = vld [vmem:[%s11 + $0x14] sm:$0xf]
          %v2430 = vld [vmem:[%s11 + $0x18] sm:$0xf]
          %v2431 = vld [vmem:[%s11 + $0x1c] sm:$0xf]
          %v2432 = vld [vmem:[%s11 + $0x20] sm:$0xf]
          %v2433 = vld [vmem:[%s11 + $0x24] sm:$0xf]
          %v2434 = vld [vmem:[%s11 + $0x28] sm:$0xf]
          %v2435 = vld [vmem:[%s11 + $0x2c] sm:$0xf]
          %v2436 = vld [vmem:[%s11 + $0x30] sm:$0xf]
          %v2437 = vld [vmem:[%s11 + $0x34] sm:$0xf]
          %v2438 = vld [vmem:[%s11 + $0x38] sm:$0xf]
          %v2439 = vld [vmem:[%s11 + $0x3c] sm:$0xf]
          %v2440 = vld [vmem:[%s12] sm:$0x1]
          %v2457 = vunpack.c.l.b16 %v2424
          %v2458 = vunpack.c.l.b16 %v2425
          %v2459 = vunpack.c.l.b16 %v2426
          %v2460 = vunpack.c.l.b16 %v2427
          %v2461 = vunpack.c.l.b16 %v2428
          %v2462 = vunpack.c.l.b16 %v2429
          %v2463 = vunpack.c.l.b16 %v2430
          %v2464 = vunpack.c.l.b16 %v2431
          %v2465 = vunpack.c.l.b16 %v2432
          %v2466 = vunpack.c.l.b16 %v2433
          %v2467 = vunpack.c.l.b16 %v2434
          %v2468 = vunpack.c.l.b16 %v2435
          %v2469 = vunpack.c.l.b16 %v2436
          %v2470 = vunpack.c.l.b16 %v2437
          %v2471 = vunpack.c.l.b16 %v2438
          %v2472 = vunpack.c.l.b16 %v2439
          %v2473 = vpack.c.b16 %v2458, %v2457
          %v2474 = vpack.c.b16 %v2460, %v2459
          %v2475 = vpack.c.b16 %v2462, %v2461
          %v2476 = vpack.c.b16 %v2464, %v2463
          %v2477 = vpack.c.b16 %v2466, %v2465
          %v2478 = vpack.c.b16 %v2468, %v2467
          %v2479 = vpack.c.b16 %v2470, %v2469
          %v2480 = vpack.c.b16 %v2472, %v2471
          %2489 = vmatprep.subr.bf16.mxu0 0
          %2490 = vmatpush1.bf16.msra.mxu0 %v2473
          %2491 = vmatprep.subr.bf16.mxu0 0
          %2492 = vmatpush1.bf16.msra.mxu0 %v2474
          %2493 = vmatprep.subr.bf16.mxu0 0
          %2494 = vmatpush1.bf16.msra.mxu0 %v2475
          %2495 = vmatprep.subr.bf16.mxu0 0
          %2496 = vmatpush1.bf16.msra.mxu0 %v2476
          %2497 = vmatprep.subr.bf16.mxu0 0
          %2498 = vmatpush1.bf16.msra.mxu0 %v2477
          %2499 = vmatprep.subr.bf16.mxu0 0
          %2500 = vmatpush1.bf16.msra.mxu0 %v2478
          %2501 = vmatprep.subr.bf16.mxu0 0
          %2502 = vmatpush1.bf16.msra.mxu0 %v2479
          %2503 = vmatprep.subr.bf16.mxu0 0
          %2504 = vmatpush1.bf16.msra.mxu0 %v2480
          %2505 = vmatprep.subr.bf16.mxu0 0
          %2506 = vmatpush1.bf16.msra.mxu0 0
          %2507 = vmatprep.subr.bf16.mxu0 0
          %2508 = vmatpush1.bf16.msra.mxu0 0
          %2509 = vmatprep.subr.bf16.mxu0 0
          %2510 = vmatpush1.bf16.msra.mxu0 0
          %2511 = vmatprep.subr.bf16.mxu0 0
          %2512 = vmatpush1.bf16.msra.mxu0 0
          %2513 = vmatprep.subr.bf16.mxu0 0
          %2514 = vmatpush1.bf16.msra.mxu0 0
          %2515 = vmatprep.subr.bf16.mxu0 0
          %2516 = vmatpush1.bf16.msra.mxu0 0
          %2517 = vmatprep.subr.bf16.mxu0 0
          %2518 = vmatpush1.bf16.msra.mxu0 0
          %2519 = vmatprep.subr.bf16.mxu0 0
          %2520 = vmatpush1.bf16.msra.mxu0 0
          %2521 = vmatprep.mubr.bf16.mxu0 0
          %2522 = vmatmul.mubr.bf16.gmra.mrb[0].mxu0 %v2423
          %v2523 = vpop.f32.mrb[0].mxu0
          %v2524 = vadd.f32 %v2440, %v2523
          %v2525 = vpop.f32.mrb[0].mxu0
          %v2526 = vpop.f32.mrb[0].mxu0
          %v2527 = vpop.f32.mrb[0].mxu0
          %2528 = vdwg.mxu0
          %2529 = vst [vmem:[%s450] sm:$0x1] %v2524
        $region80: #{tpu_custom_call.1} parent=71 // pred_fallthru
          _
        %s2530 = sand.u32 %s327, 1
        %s2531 = scalar_lea.sflag [#allocation4], %s2530
        %s2532 = sand.u32 %s327, 1
        %s2533 = scalar_lea.vmem [#allocation3], %s2532
        // Predicated region
        $region81: #{tpu_custom_call.1} parent=71 // pred_check
          %p2534 = pneg %p337
        $region82: #{tpu_custom_call.1} parent=71 // pred_check_branch
          %2536 = sbr.rel (%p2534) target = $region84
        $region83: #{tpu_custom_call.1} parent=71 // pred_region
          %s2538 = ssub.s32 16, 16
          %2539 = vsyncadd %s2531, %s2538
          %s2540 = smul.addr %s31, 16
          %s2541 = scalar_lea.hbm %s13, %s2540
          %s2543 = sshll.u32 %s2533, 4
          %s2544 = int_to_ptr.vmem [resolvable:$true] %s2543
          %2546 = dma.vmem_to_hbm [thread:$0]  %s2544, 16, %s2541, %s2531
        $region84: #{tpu_custom_call.1} parent=71 // pred_fallthru
          _
      $region72: #{tpu_custom_call.1} parent=5 // pred_fallthru
        _
      %p2547 = scmp.le.s32.totalorder 2, %s22
      // Predicated region
      $region85: #{tpu_custom_call.1} parent=5 // pred_check
        %p2548 = pneg %p2547
      $region86: #{tpu_custom_call.1} parent=5 // pred_check_branch
        %2550 = sbr.rel (%p2548) target = $region88
      $region87: #{tpu_custom_call.1} parent=5 // pred_region
        %s2551 = ssub.s32 %s22, 2
        // Predicated region
        $region89: #{tpu_custom_call.1} parent=87 // pred_check
          %p2552 = pneg %p343
        $region90: #{tpu_custom_call.1} parent=87 // pred_check_branch
          %2554 = sbr.rel (%p2552) target = $region92
        $region91: #{tpu_custom_call.1} parent=87 // pred_region
          %s2555 = sand.u32 %s328, 1
          %s2556 = scalar_lea.sflag [#allocation4], %s2555
          %s2557 = sand.u32 %s328, 1
          %s2558 = scalar_lea.vmem [#allocation3], %s2557
          %2559 = dma.done %s2556, 16
        $region92: #{tpu_custom_call.1} parent=87 // pred_fallthru
          _
      $region88: #{tpu_custom_call.1} parent=5 // pred_fallthru
        _
    $region6: #{tpu_custom_call.1} parent=1 // loop_footer
      %s26 = sadd.s32 1, %s22
    $region7: #{tpu_custom_call.1} parent=1 // loop_footer_branch
      %21 = sbr.rel target = $region3
    $region8: #{tpu_custom_call.1} parent=1 // loop_exit
      _
    %2560 = vsyncpa [#allocation4], 1
    %s2561 = scalar_lea.sflag [#allocation4], 1
    %2562 = vsyncpa %s2561, 1

</llo_original>
